<compile_context>
chip_gen: v5e
topology: v5e:2x2
jax: 0.10.0
libtpu: 0.0.40
codegen_flags: <defaults>
</compile_context>

<pallas_src>
import functools

import jax
import jax.numpy as jnp
import numpy as np
from jax import lax
from jax.experimental import pallas as pl
from jax.experimental.pallas import tpu as pltpu

LANE = 128


def _round_up(x, m):
    return ((x + m - 1) // m) * m


def _pad_axis(a, target, axis):
    if a.shape[axis] == target:
        return a
    pad = [(0, 0)] * a.ndim
    pad[axis] = (0, target - a.shape[axis])
    return jnp.pad(a, pad)


# ----------------------------------------------------------------------------
# Kernel 1: fused  Y = X @ W + b  (+ optional ReLU).  bf16 operands, f32 accum.
# ----------------------------------------------------------------------------
def _matmul_bias_kernel(x_ref, w_ref, b_ref, o_ref, *, relu):
    y = jnp.dot(x_ref[...], w_ref[...], preferred_element_type=jnp.float32)
    y = y + b_ref[...]                      # bias + ReLU kept in f32 (v5e-safe)
    if relu:
        y = jnp.maximum(y, 0.0)
    o_ref[...] = y.astype(o_ref.dtype)


def pallas_linear(x, w, b2, *, relu, out_dtype=jnp.float32, block_m=256):
    """x: (M, K), w: (K, N), b2: (1, N) -> (M, N).  K, N are multiples of 128."""
    M, K = x.shape
    Kw, N = w.shape
    assert K == Kw and b2.shape == (1, N)
    kernel = functools.partial(_matmul_bias_kernel, relu=relu)

    if M % block_m == 0 and M // block_m > 1:
        # Large-batch path: tile M so DMA overlaps compute; "parallel" lets
        # Mosaic shard the M axis across v7x's 2 TensorCores.
        return pl.pallas_call(
            kernel,
            out_shape=jax.ShapeDtypeStruct((M, N), out_dtype),
            grid=(M // block_m,),
            in_specs=[
                pl.BlockSpec((block_m, K), lambda i: (i, 0)),
                pl.BlockSpec((K, N), lambda i: (0, 0)),
                pl.BlockSpec((1, N), lambda i: (0, 0)),
            ],
            out_specs=pl.BlockSpec((block_m, N), lambda i: (i, 0)),
            compiler_params=pltpu.CompilerParams(
                dimension_semantics=("parallel",)),
        )(x, w, b2)

    # Small-batch path: single full-extent block (fits VMEM easily).
    return pl.pallas_call(
        kernel,
        out_shape=jax.ShapeDtypeStruct((M, N), out_dtype),
        in_specs=[
            pl.BlockSpec((M, K), lambda: (0, 0)),
            pl.BlockSpec((K, N), lambda: (0, 0)),
            pl.BlockSpec((1, N), lambda: (0, 0)),
        ],
        out_specs=pl.BlockSpec((M, N), lambda: (0, 0)),
    )(x, w, b2)


# ----------------------------------------------------------------------------
# Kernel 2: fused tail:  relu(flat @ Wl + bl) @ [Wv | Wa] + [bv | ba]
# One kernel, hidden activation never leaves VMEM, one lane-dense (128) store.
# ----------------------------------------------------------------------------
def _tail_kernel(x_ref, wl_ref, bl_ref, wh_ref, bh_ref, o_ref):
    h = jnp.dot(x_ref[...], wl_ref[...], preferred_element_type=jnp.float32)
    h = jnp.maximum(h + bl_ref[...], 0.0)
    y = jnp.dot(h.astype(jnp.bfloat16), wh_ref[...],
                preferred_element_type=jnp.float32)
    o_ref[...] = (y + bh_ref[...]).astype(o_ref.dtype)


def pallas_tail(flat, wl, bl, wh, bh):
    M, K = flat.shape
    H = wl.shape[1]
    NO = wh.shape[1]
    return pl.pallas_call(
        _tail_kernel,
        out_shape=jax.ShapeDtypeStruct((M, NO), jnp.float32),
        in_specs=[
            pl.BlockSpec((M, K), lambda: (0, 0)),
            pl.BlockSpec((K, H), lambda: (0, 0)),
            pl.BlockSpec((1, H), lambda: (0, 0)),
            pl.BlockSpec((H, NO), lambda: (0, 0)),
            pl.BlockSpec((1, NO), lambda: (0, 0)),
        ],
        out_specs=pl.BlockSpec((M, NO), lambda: (0, 0)),
    )(flat, wl, bl, wh, bh)


# ----------------------------------------------------------------------------
# One-time parameter preparation (layout permutes, lane padding, bf16 cast)
# ----------------------------------------------------------------------------
def prepare_params(params):
    c1w, c1b = params["conv1_w"], params["conv1_b"]
    c2w, c2b = params["conv2_w"], params["conv2_b"]
    O1, I1, KH1, KW1 = c1w.shape
    O2, I2, KH2, KW2 = c2w.shape
    O1p, O2p = _round_up(O1, LANE), _round_up(O2, LANE)

    # conv1: rows ordered (I, KH, KW) to match conv_general_dilated_patches'
    # feature ordering ("c" + rhs spatial dims); output cols padded to 128.
    w1m = jnp.transpose(c1w, (1, 2, 3, 0)).reshape(I1 * KH1 * KW1, O1)
    w1m = _pad_axis(w1m, O1p, 1).astype(jnp.bfloat16)
    b1 = _pad_axis(c1b, O1p, 0).reshape(1, O1p).astype(jnp.float32)

    # conv2: input-channel rows zero-padded to match conv1's padded output.
    w2t = jnp.transpose(c2w, (1, 2, 3, 0))          # (I2, KH2, KW2, O2)
    w2t = _pad_axis(w2t, O1p, 0)
    w2t = _pad_axis(w2t, O2p, 3)
    w2m = w2t.reshape(O1p * KH2 * KW2, O2p).astype(jnp.bfloat16)
    b2 = _pad_axis(c2b, O2p, 0).reshape(1, O2p).astype(jnp.float32)

    # linear: PyTorch flatten order is (C, H, W); activations here are NHWC
    # with padded channels, so permute rows once to ((H*W), C_pad) order.
    lin_w, lin_b = params["lin_w"], params["lin_b"]
    hid = lin_w.shape[1]
    n_pos = lin_w.shape[0] // O2                    # = OH2 * OW2
    linm = jnp.transpose(lin_w.reshape(O2, n_pos, hid), (1, 0, 2))
    linm = _pad_axis(linm, O2p, 1).reshape(n_pos * O2p, hid).astype(jnp.bfloat16)
    lin_b2 = lin_b.reshape(1, hid).astype(jnp.float32)

    # heads: fuse [value | action] into one matmul, pad cols to 128.
    head_w = jnp.concatenate([params["val_w"], params["act_w"]], axis=1)
    head_b = jnp.concatenate([params["val_b"], params["act_b"]], axis=0)
    NHp = _round_up(head_w.shape[1], LANE)
    headm = _pad_axis(head_w, NHp, 1).astype(jnp.bfloat16)
    head_b2 = _pad_axis(head_b, NHp, 0).reshape(1, NHp).astype(jnp.float32)

    return {
        "w1m": w1m, "b1": b1,
        "w2m": w2m, "b2": b2,
        "linm": linm, "lin_b2": lin_b2,
        "headm": headm, "head_b2": head_b2,
    }


# ----------------------------------------------------------------------------
# Full forward pass (AtariSize.SMALL)
# ----------------------------------------------------------------------------
def atari_forward(x_nchw, p, *, output_size):
    N = x_nchw.shape[0]
    x = jnp.transpose(x_nchw, (0, 2, 3, 1)).astype(jnp.bfloat16)  # NHWC, bf16

    # conv1: one patches op + Pallas matmul(+bias+ReLU), 128-lane output.
    p1 = lax.conv_general_dilated_patches(
        x, filter_shape=(8, 8), window_strides=(4, 4), padding="VALID",
        dimension_numbers=("NHWC", "HWIO", "NHWC"))
    _, OH1, OW1, F1 = p1.shape
    a1 = pallas_linear(p1.reshape(N * OH1 * OW1, F1), p["w1m"], p["b1"],
                       relu=True, out_dtype=jnp.bfloat16)
    a1 = a1.reshape(N, OH1, OW1, p["w1m"].shape[1])

    # conv2 (input channels stay lane-padded; padded weight rows are zero).
    p2 = lax.conv_general_dilated_patches(
        a1, filter_shape=(4, 4), window_strides=(2, 2), padding="VALID",
        dimension_numbers=("NHWC", "HWIO", "NHWC"))
    _, OH2, OW2, F2 = p2.shape
    a2 = pallas_linear(p2.reshape(N * OH2 * OW2, F2), p["w2m"], p["b2"],
                       relu=True, out_dtype=jnp.bfloat16)

    # fused tail: NHWC flatten (lin weight rows pre-permuted, so no transpose)
    # -> linear+ReLU -> fused [value | action] heads, single lane-dense store.
    flat = a2.reshape(N, OH2 * OW2 * p["w2m"].shape[1])
    out = pallas_tail(flat, p["linm"], p["lin_b2"], p["headm"], p["head_b2"])
    value = out[:, :1]
    action_logits = out[:, 1:1 + output_size]
    return action_logits, value


# ----------------------------------------------------------------------------
# Pure-JAX f32 reference (correctness check only)
# ----------------------------------------------------------------------------
def atari_forward_ref(x_nchw, params):
    dn = ("NCHW", "OIHW", "NCHW")
    x = lax.conv_general_dilated(x_nchw, params["conv1_w"], (4, 4), "VALID",
                                 dimension_numbers=dn)
    x = jnp.maximum(x + params["conv1_b"][None, :, None, None], 0.0)
    x = lax.conv_general_dilated(x, params["conv2_w"], (2, 2), "VALID",
                                 dimension_numbers=dn)
    x = jnp.maximum(x + params["conv2_b"][None, :, None, None], 0.0)
    flat = x.reshape(x.shape[0], -1)
    h = jnp.maximum(flat @ params["lin_w"] + params["lin_b"], 0.0)
    value = h @ params["val_w"] + params["val_b"]
    action_logits = h @ params["act_w"] + params["act_b"]
    return action_logits, value


# ----------------------------------------------------------------------------
# Deterministic parameter init (shapes follow AtariSize.SMALL)
# ----------------------------------------------------------------------------
def init_params(key, input_hw, output_size):
    H, W = input_hw
    oh1, ow1 = (H - 8) // 4 + 1, (W - 8) // 4 + 1
    oh2, ow2 = (oh1 - 4) // 2 + 1, (ow1 - 4) // 2 + 1
    linear_shape = 32 * oh2 * ow2
    linear_output = 256

    ks = jax.random.split(key, 10)
    scale = 0.05
    params = {
        "conv1_w": scale * jax.random.normal(ks[0], (16, 4, 8, 8), jnp.float32),
        "conv1_b": scale * jax.random.normal(ks[1], (16,), jnp.float32),
        "conv2_w": scale * jax.random.normal(ks[2], (32, 16, 4, 4), jnp.float32),
        "conv2_b": scale * jax.random.normal(ks[3], (32,), jnp.float32),
        "lin_w": scale * jax.random.normal(ks[4], (linear_shape, linear_output), jnp.float32),
        "lin_b": scale * jax.random.normal(ks[5], (linear_output,), jnp.float32),
        "val_w": scale * jax.random.normal(ks[6], (linear_output, 1), jnp.float32),
        "val_b": scale * jax.random.normal(ks[7], (1,), jnp.float32),
        "act_w": scale * jax.random.normal(ks[8], (linear_output, output_size), jnp.float32),
        "act_b": scale * jax.random.normal(ks[9], (output_size,), jnp.float32),
    }
    return params


if __name__ == "__main__":
    key = jax.random.PRNGKey(0)
    k_x, k_p = jax.random.split(key)

    # Small Atari-like observation: (batch=2, channels=4, H=36, W=36).
    # (36 -> conv1/s4 -> 8 -> conv2/s2 -> 3; linear_shape = 32*3*3 = 288)
    N, C, H, W = 2, 4, 36, 36
    output_size = 6

    x = jax.random.normal(k_x, (N, C, H, W), jnp.float32)
    params = init_params(k_p, (H, W), output_size)
    prepped = prepare_params(params)   # one-time layout/padding/bf16 prep

    fwd = jax.jit(functools.partial(atari_forward, output_size=output_size))
    action_logits, value = fwd(x, prepped)
    action_logits = jax.block_until_ready(action_logits)
    value = jax.block_until_ready(value)

    ref_logits, ref_value = atari_forward_ref(x, params)
    # bf16 matmul operands with f32 accumulation -> loosened tolerance vs f32 ref.
    np.testing.assert_allclose(np.asarray(action_logits), np.asarray(ref_logits),
                               rtol=2e-2, atol=2e-2)
    np.testing.assert_allclose(np.asarray(value), np.asarray(ref_value),
                               rtol=2e-2, atol=2e-2)

    assert action_logits.shape == (N, output_size)
    assert value.shape == (N, 1)
    print("KERNEL_OK")
</pallas_src>

<mosaic_0001>
module attributes {stable_mosaic.version = 11 : i64} {
  func.func @_matmul_bias_kernel(%arg0: memref<128x256xbf16, #tpu.memory_space<vmem>>, %arg1: memref<256x128xbf16, #tpu.memory_space<vmem>>, %arg2: memref<1x128xf32, #tpu.memory_space<vmem>>, %arg3: memref<128x128xbf16, #tpu.memory_space<vmem>>) attributes {dimension_semantics = [], scalar_prefetch = 0 : i64, scratch_operands = 0 : i64, tpu.core_type = #tpu.core_type<tc>} {
    %c0 = arith.constant 0 : index
    %c0_0 = arith.constant 0 : index
    %0 = vector.load %arg0[%c0, %c0_0] : memref<128x256xbf16, #tpu.memory_space<vmem>>, vector<128x256xbf16>
    %c0_1 = arith.constant 0 : index
    %c0_2 = arith.constant 0 : index
    %1 = vector.load %arg1[%c0_1, %c0_2] : memref<256x128xbf16, #tpu.memory_space<vmem>>, vector<256x128xbf16>
    %cst = arith.constant dense<0.000000e+00> : vector<128x128xf32>
    %2 = tpu.matmul %0, %1, %cst {dimension_numbers = #tpu.dot_dimension_numbers<[1], [0], [0], [1], [0, 0, 1, 1], [], []>} : vector<128x256xbf16>, vector<256x128xbf16>, vector<128x128xf32> -> vector<128x128xf32>
    %c0_3 = arith.constant 0 : index
    %c0_4 = arith.constant 0 : index
    %3 = vector.load %arg2[%c0_3, %c0_4] : memref<1x128xf32, #tpu.memory_space<vmem>>, vector<1x128xf32>
    %4 = vector.broadcast %3 : vector<1x128xf32> to vector<128x128xf32>
    %5 = arith.addf %2, %4 : vector<128x128xf32>
    %cst_5 = arith.constant 0.000000e+00 : f32
    %6 = vector.broadcast %cst_5 : f32 to vector<128x128xf32>
    %7 = arith.maximumf %5, %6 : vector<128x128xf32>
    %8 = arith.truncf %7 : vector<128x128xf32> to vector<128x128xbf16>
    %c0_6 = arith.constant 0 : index
    %c0_7 = arith.constant 0 : index
    %9 = vector.load %arg3[%c0_6, %c0_7] : memref<128x128xbf16, #tpu.memory_space<vmem>>, vector<128x128xbf16>
    tpu.vector_store %arg3[%c0_6, %c0_7], %8 {strides = array<i32>} : memref<128x128xbf16, #tpu.memory_space<vmem>>, vector<128x128xbf16>,
    return
  }
}

module attributes {stable_mosaic.version = 11 : i64} {
  func.func @_matmul_bias_kernel(%arg0: memref<18x2048xbf16, #tpu.memory_space<vmem>>, %arg1: memref<2048x128xbf16, #tpu.memory_space<vmem>>, %arg2: memref<1x128xf32, #tpu.memory_space<vmem>>, %arg3: memref<18x128xbf16, #tpu.memory_space<vmem>>) attributes {dimension_semantics = [], scalar_prefetch = 0 : i64, scratch_operands = 0 : i64, tpu.core_type = #tpu.core_type<tc>} {
    %c0 = arith.constant 0 : index
    %c0_0 = arith.constant 0 : index
    %0 = vector.load %arg0[%c0, %c0_0] : memref<18x2048xbf16, #tpu.memory_space<vmem>>, vector<18x2048xbf16>
    %c0_1 = arith.constant 0 : index
    %c0_2 = arith.constant 0 : index
    %1 = vector.load %arg1[%c0_1, %c0_2] : memref<2048x128xbf16, #tpu.memory_space<vmem>>, vector<2048x128xbf16>
    %cst = arith.constant dense<0.000000e+00> : vector<18x128xf32>
    %2 = tpu.matmul %0, %1, %cst {dimension_numbers = #tpu.dot_dimension_numbers<[1], [0], [0], [1], [0, 0, 1, 1], [], []>} : vector<18x2048xbf16>, vector<2048x128xbf16>, vector<18x128xf32> -> vector<18x128xf32>
    %c0_3 = arith.constant 0 : index
    %c0_4 = arith.constant 0 : index
    %3 = vector.load %arg2[%c0_3, %c0_4] : memref<1x128xf32, #tpu.memory_space<vmem>>, vector<1x128xf32>
    %4 = vector.broadcast %3 : vector<1x128xf32> to vector<18x128xf32>
    %5 = arith.addf %2, %4 : vector<18x128xf32>
    %cst_5 = arith.constant 0.000000e+00 : f32
    %6 = vector.broadcast %cst_5 : f32 to vector<18x128xf32>
    %7 = arith.maximumf %5, %6 : vector<18x128xf32>
    %8 = arith.truncf %7 : vector<18x128xf32> to vector<18x128xbf16>
    %c0_6 = arith.constant 0 : index
    %c0_7 = arith.constant 0 : index
    %9 = vector.load %arg3[%c0_6, %c0_7] : memref<18x128xbf16, #tpu.memory_space<vmem>>, vector<18x128xbf16>
    tpu.vector_store %arg3[%c0_6, %c0_7], %8 {strides = array<i32>} : memref<18x128xbf16, #tpu.memory_space<vmem>>, vector<18x128xbf16>,
    return
  }
}

module attributes {stable_mosaic.version = 11 : i64} {
  func.func @_tail_kernel(%arg0: memref<2x1152xbf16, #tpu.memory_space<vmem>>, %arg1: memref<1152x256xbf16, #tpu.memory_space<vmem>>, %arg2: memref<1x256xf32, #tpu.memory_space<vmem>>, %arg3: memref<256x128xbf16, #tpu.memory_space<vmem>>, %arg4: memref<1x128xf32, #tpu.memory_space<vmem>>, %arg5: memref<2x128xf32, #tpu.memory_space<vmem>>) attributes {dimension_semantics = [], scalar_prefetch = 0 : i64, scratch_operands = 0 : i64, tpu.core_type = #tpu.core_type<tc>} {
    %c0 = arith.constant 0 : index
    %c0_0 = arith.constant 0 : index
    %0 = vector.load %arg0[%c0, %c0_0] : memref<2x1152xbf16, #tpu.memory_space<vmem>>, vector<2x1152xbf16>
    %c0_1 = arith.constant 0 : index
    %c0_2 = arith.constant 0 : index
    %1 = vector.load %arg1[%c0_1, %c0_2] : memref<1152x256xbf16, #tpu.memory_space<vmem>>, vector<1152x256xbf16>
    %cst = arith.constant dense<0.000000e+00> : vector<2x256xf32>
    %2 = tpu.matmul %0, %1, %cst {dimension_numbers = #tpu.dot_dimension_numbers<[1], [0], [0], [1], [0, 0, 1, 1], [], []>} : vector<2x1152xbf16>, vector<1152x256xbf16>, vector<2x256xf32> -> vector<2x256xf32>
    %c0_3 = arith.constant 0 : index
    %c0_4 = arith.constant 0 : index
    %3 = vector.load %arg2[%c0_3, %c0_4] : memref<1x256xf32, #tpu.memory_space<vmem>>, vector<1x256xf32>
    %4 = vector.broadcast %3 : vector<1x256xf32> to vector<2x256xf32>
    %5 = arith.addf %2, %4 : vector<2x256xf32>
    %cst_5 = arith.constant 0.000000e+00 : f32
    %6 = vector.broadcast %cst_5 : f32 to vector<2x256xf32>
    %7 = arith.maximumf %5, %6 : vector<2x256xf32>
    %8 = arith.truncf %7 : vector<2x256xf32> to vector<2x256xbf16>
    %c0_6 = arith.constant 0 : index
    %c0_7 = arith.constant 0 : index
    %9 = vector.load %arg3[%c0_6, %c0_7] : memref<256x128xbf16, #tpu.memory_space<vmem>>, vector<256x128xbf16>
    %cst_8 = arith.constant dense<0.000000e+00> : vector<2x128xf32>
    %10 = tpu.matmul %8, %9, %cst_8 {dimension_numbers = #tpu.dot_dimension_numbers<[1], [0], [0], [1], [0, 0, 1, 1], [], []>} : vector<2x256xbf16>, vector<256x128xbf16>, vector<2x128xf32> -> vector<2x128xf32>
    %c0_9 = arith.constant 0 : index
    %c0_10 = arith.constant 0 : index
    %11 = vector.load %arg4[%c0_9, %c0_10] : memref<1x128xf32, #tpu.memory_space<vmem>>, vector<1x128xf32>
    %12 = vector.broadcast %11 : vector<1x128xf32> to vector<2x128xf32>
    %13 = arith.addf %10, %12 : vector<2x128xf32>
    %c0_11 = arith.constant 0 : index
    %c0_12 = arith.constant 0 : index
    %14 = vector.load %arg5[%c0_11, %c0_12] : memref<2x128xf32, #tpu.memory_space<vmem>>, vector<2x128xf32>
    tpu.vector_store %arg5[%c0_11, %c0_12], %13 {strides = array<i32>} : memref<2x128xf32, #tpu.memory_space<vmem>>, vector<2x128xf32>,
    return
  }
}

</mosaic_0001>

<llo_original>
// kernel: atari_forward.3
$region0: #{atari_forward.3}
  #allocation0 [shape = 'u32[]', space=smem, size = 0x4, offset = 0x4, fixed_abs, tag = 'smem constant byte address 0x4 - core index']
  #allocation1 [shape = 'u32[72,128]{1,0:T(1,128)}', space=vmem, size = 0x9000, scoped, tag = 'internal scratch']
  %s0 = inlined_call_operand.vmem [shape: bf16[128,256], index: 0, kind: input, shape index: {}]
  %s1 = inlined_call_operand.vmem [shape: bf16[256,128], index: 1, kind: input, shape index: {}]
  %s2 = inlined_call_operand.vmem [shape: f32[1,128], index: 2, kind: input, shape index: {}]
  %s3 = inlined_call_operand.vmem [shape: bf16[128,128], index: 3, kind: output, shape index: {}]
  %s4 = sld [smem:[#allocation0]]
  $region22: #{atari_forward.3} parent=0
    _
  %s6 = ssub.s32 1, %s4
  %s7 = scalar_select 0, %s6, %s4
  // Predicated region
  $region2: #{atari_forward.3} parent=0 // pred_check
    _
  $region3: #{atari_forward.3} parent=0 // pred_check_branch
    %9 = sbr.rel (0) target = $region5
  $region4: #{atari_forward.3} parent=0 // pred_region
    _
  $region5: #{atari_forward.3} parent=0 // pred_fallthru
    _
  // Predicated region
  $region6: #{atari_forward.3} parent=0 // pred_check
    _
  $region7: #{atari_forward.3} parent=0 // pred_check_branch
    %11 = sbr.rel (0) target = $region9
  $region8: #{atari_forward.3} parent=0 // pred_region
    _
  $region9: #{atari_forward.3} parent=0 // pred_fallthru
    _
  // Predicated region
  $region10: #{atari_forward.3} parent=0 // pred_check
    _
  $region11: #{atari_forward.3} parent=0 // pred_check_branch
    %13 = sbr.rel (0) target = $region13
  $region12: #{atari_forward.3} parent=0 // pred_region
    _
  $region13: #{atari_forward.3} parent=0 // pred_fallthru
    _
  %v14 = vld [vmem:[%s0] sm:$0xff]
  %v15 = vld [vmem:[%s0 + $0x8] sm:$0xff]
  %v16 = vld [vmem:[%s0 + $0x10] sm:$0xff]
  %v17 = vld [vmem:[%s0 + $0x18] sm:$0xff]
  %v18 = vld [vmem:[%s0 + $0x20] sm:$0xff]
  %v19 = vld [vmem:[%s0 + $0x28] sm:$0xff]
  %v20 = vld [vmem:[%s0 + $0x30] sm:$0xff]
  %v21 = vld [vmem:[%s0 + $0x38] sm:$0xff]
  %v22 = vld [vmem:[%s0 + $0x40] sm:$0xff]
  %v23 = vld [vmem:[%s0 + $0x48] sm:$0xff]
  %v24 = vld [vmem:[%s0 + $0x50] sm:$0xff]
  %v25 = vld [vmem:[%s0 + $0x58] sm:$0xff]
  %v26 = vld [vmem:[%s0 + $0x60] sm:$0xff]
  %v27 = vld [vmem:[%s0 + $0x68] sm:$0xff]
  %v28 = vld [vmem:[%s0 + $0x70] sm:$0xff]
  %v29 = vld [vmem:[%s0 + $0x78] sm:$0xff]
  %v30 = vld [vmem:[%s1] sm:$0xf]
  %v31 = vld [vmem:[%s1 + $0x4] sm:$0xf]
  %v32 = vld [vmem:[%s1 + $0x8] sm:$0xf]
  %v33 = vld [vmem:[%s1 + $0xc] sm:$0xf]
  %v34 = vld [vmem:[%s1 + $0x10] sm:$0xf]
  %v35 = vld [vmem:[%s1 + $0x14] sm:$0xf]
  %v36 = vld [vmem:[%s1 + $0x18] sm:$0xf]
  %v37 = vld [vmem:[%s1 + $0x1c] sm:$0xf]
  %v38 = vld [vmem:[%s1 + $0x20] sm:$0xf]
  %v39 = vld [vmem:[%s1 + $0x24] sm:$0xf]
  %v40 = vld [vmem:[%s1 + $0x28] sm:$0xf]
  %v41 = vld [vmem:[%s1 + $0x2c] sm:$0xf]
  %v42 = vld [vmem:[%s1 + $0x30] sm:$0xf]
  %v43 = vld [vmem:[%s1 + $0x34] sm:$0xf]
  %v44 = vld [vmem:[%s1 + $0x38] sm:$0xf]
  %v45 = vld [vmem:[%s1 + $0x3c] sm:$0xf]
  %v46 = vld [vmem:[%s1 + $0x40] sm:$0xf]
  %v47 = vld [vmem:[%s1 + $0x44] sm:$0xf]
  %v48 = vld [vmem:[%s1 + $0x48] sm:$0xf]
  %v49 = vld [vmem:[%s1 + $0x4c] sm:$0xf]
  %v50 = vld [vmem:[%s1 + $0x50] sm:$0xf]
  %v51 = vld [vmem:[%s1 + $0x54] sm:$0xf]
  %v52 = vld [vmem:[%s1 + $0x58] sm:$0xf]
  %v53 = vld [vmem:[%s1 + $0x5c] sm:$0xf]
  %v54 = vld [vmem:[%s1 + $0x60] sm:$0xf]
  %v55 = vld [vmem:[%s1 + $0x64] sm:$0xf]
  %v56 = vld [vmem:[%s1 + $0x68] sm:$0xf]
  %v57 = vld [vmem:[%s1 + $0x6c] sm:$0xf]
  %v58 = vld [vmem:[%s1 + $0x70] sm:$0xf]
  %v59 = vld [vmem:[%s1 + $0x74] sm:$0xf]
  %v60 = vld [vmem:[%s1 + $0x78] sm:$0xf]
  %v61 = vld [vmem:[%s1 + $0x7c] sm:$0xf]
  %v62 = vld [vmem:[%s2] sm:$0x1]
  %v64 = vperm.slane %v62, 0
  %v82 = vunpack.c.l.b16 %v14
  %v83 = vunpack.c.h.b16 %v14
  %v84 = vunpack.c.l.b16 %v15
  %v85 = vunpack.c.h.b16 %v15
  %v86 = vunpack.c.l.b16 %v16
  %v87 = vunpack.c.h.b16 %v16
  %v88 = vunpack.c.l.b16 %v17
  %v89 = vunpack.c.h.b16 %v17
  %v90 = vunpack.c.l.b16 %v18
  %v91 = vunpack.c.h.b16 %v18
  %v92 = vunpack.c.l.b16 %v19
  %v93 = vunpack.c.h.b16 %v19
  %v94 = vunpack.c.l.b16 %v20
  %v95 = vunpack.c.h.b16 %v20
  %v96 = vunpack.c.l.b16 %v21
  %v97 = vunpack.c.h.b16 %v21
  %v98 = vunpack.c.l.b16 %v22
  %v99 = vunpack.c.h.b16 %v22
  %v100 = vunpack.c.l.b16 %v23
  %v101 = vunpack.c.h.b16 %v23
  %v102 = vunpack.c.l.b16 %v24
  %v103 = vunpack.c.h.b16 %v24
  %v104 = vunpack.c.l.b16 %v25
  %v105 = vunpack.c.h.b16 %v25
  %v106 = vunpack.c.l.b16 %v26
  %v107 = vunpack.c.h.b16 %v26
  %v108 = vunpack.c.l.b16 %v27
  %v109 = vunpack.c.h.b16 %v27
  %v110 = vunpack.c.l.b16 %v28
  %v111 = vunpack.c.h.b16 %v28
  %v112 = vunpack.c.l.b16 %v29
  %v113 = vunpack.c.h.b16 %v29
  %v114 = vpack.c.b16 %v84, %v82
  %v115 = vpack.c.b16 %v85, %v83
  %v116 = vpack.c.b16 %v88, %v86
  %v117 = vpack.c.b16 %v89, %v87
  %v118 = vpack.c.b16 %v92, %v90
  %v119 = vpack.c.b16 %v93, %v91
  %v120 = vpack.c.b16 %v96, %v94
  %v121 = vpack.c.b16 %v97, %v95
  %v122 = vpack.c.b16 %v100, %v98
  %v123 = vpack.c.b16 %v101, %v99
  %v124 = vpack.c.b16 %v104, %v102
  %v125 = vpack.c.b16 %v105, %v103
  %v126 = vpack.c.b16 %v108, %v106
  %v127 = vpack.c.b16 %v109, %v107
  %v128 = vpack.c.b16 %v112, %v110
  %v129 = vpack.c.b16 %v113, %v111
  %v178 = vunpack.c.l.b16 %v30
  %v179 = vunpack.c.l.b16 %v31
  %v180 = vunpack.c.l.b16 %v32
  %v181 = vunpack.c.l.b16 %v33
  %v182 = vunpack.c.l.b16 %v34
  %v183 = vunpack.c.l.b16 %v35
  %v184 = vunpack.c.l.b16 %v36
  %v185 = vunpack.c.l.b16 %v37
  %v186 = vunpack.c.l.b16 %v38
  %v187 = vunpack.c.l.b16 %v39
  %v188 = vunpack.c.l.b16 %v40
  %v189 = vunpack.c.l.b16 %v41
  %v190 = vunpack.c.l.b16 %v42
  %v191 = vunpack.c.l.b16 %v43
  %v192 = vunpack.c.l.b16 %v44
  %v193 = vunpack.c.l.b16 %v45
  %v194 = vunpack.c.l.b16 %v46
  %v195 = vunpack.c.l.b16 %v47
  %v196 = vunpack.c.l.b16 %v48
  %v197 = vunpack.c.l.b16 %v49
  %v198 = vunpack.c.l.b16 %v50
  %v199 = vunpack.c.l.b16 %v51
  %v200 = vunpack.c.l.b16 %v52
  %v201 = vunpack.c.l.b16 %v53
  %v202 = vunpack.c.l.b16 %v54
  %v203 = vunpack.c.l.b16 %v55
  %v204 = vunpack.c.l.b16 %v56
  %v205 = vunpack.c.l.b16 %v57
  %v206 = vunpack.c.l.b16 %v58
  %v207 = vunpack.c.l.b16 %v59
  %v208 = vunpack.c.l.b16 %v60
  %v209 = vunpack.c.l.b16 %v61
  %v210 = vpack.c.b16 %v179, %v178
  %v211 = vpack.c.b16 %v181, %v180
  %v212 = vpack.c.b16 %v183, %v182
  %v213 = vpack.c.b16 %v185, %v184
  %v214 = vpack.c.b16 %v187, %v186
  %v215 = vpack.c.b16 %v189, %v188
  %v216 = vpack.c.b16 %v191, %v190
  %v217 = vpack.c.b16 %v193, %v192
  %v218 = vpack.c.b16 %v195, %v194
  %v219 = vpack.c.b16 %v197, %v196
  %v220 = vpack.c.b16 %v199, %v198
  %v221 = vpack.c.b16 %v201, %v200
  %v222 = vpack.c.b16 %v203, %v202
  %v223 = vpack.c.b16 %v205, %v204
  %v224 = vpack.c.b16 %v207, %v206
  %v225 = vpack.c.b16 %v209, %v208
  %242 = vmatpush.bf16.msra.mxu0 %v217
  %243 = vmatpush.bf16.msra.mxu0 %v216
  %244 = vmatpush.bf16.msra.mxu0 %v215
  %245 = vmatpush.bf16.msra.mxu0 %v214
  %246 = vmatpush.bf16.msra.mxu0 %v213
  %247 = vmatpush.bf16.msra.mxu0 %v212
  %248 = vmatpush.bf16.msra.mxu0 %v211
  %249 = vmatpush.bf16.msra.mxu0 %v210
  %250 = vmatmul.bf16.gmra.mxu0 %v114
  %v251 = vpop.f32.mrf.mxu0
  %v252 = vadd.f32 %v64, %v251
  %v253 = vpop.f32.mrf.mxu0
  %v254 = vadd.f32 %v64, %v253
  %255 = vmatmul.bf16.gmra.mxu0 %v116
  %v256 = vpop.f32.mrf.mxu0
  %v257 = vadd.f32 %v64, %v256
  %v258 = vpop.f32.mrf.mxu0
  %v259 = vadd.f32 %v64, %v258
  %260 = vmatmul.bf16.gmra.mxu0 %v118
  %v261 = vpop.f32.mrf.mxu0
  %v262 = vadd.f32 %v64, %v261
  %v263 = vpop.f32.mrf.mxu0
  %v264 = vadd.f32 %v64, %v263
  %265 = vmatmul.bf16.gmra.mxu0 %v120
  %v266 = vpop.f32.mrf.mxu0
  %v267 = vadd.f32 %v64, %v266
  %v268 = vpop.f32.mrf.mxu0
  %v269 = vadd.f32 %v64, %v268
  %270 = vmatmul.bf16.gmra.mxu0 %v122
  %v271 = vpop.f32.mrf.mxu0
  %v272 = vadd.f32 %v64, %v271
  %v273 = vpop.f32.mrf.mxu0
  %v274 = vadd.f32 %v64, %v273
  %275 = vmatmul.bf16.gmra.mxu0 %v124
  %v276 = vpop.f32.mrf.mxu0
  %v277 = vadd.f32 %v64, %v276
  %v278 = vpop.f32.mrf.mxu0
  %v279 = vadd.f32 %v64, %v278
  %280 = vmatmul.bf16.gmra.mxu0 %v126
  %v281 = vpop.f32.mrf.mxu0
  %v282 = vadd.f32 %v64, %v281
  %v283 = vpop.f32.mrf.mxu0
  %v284 = vadd.f32 %v64, %v283
  %285 = vmatmul.bf16.gmra.mxu0 %v128
  %v286 = vpop.f32.mrf.mxu0
  %v287 = vadd.f32 %v64, %v286
  %v288 = vpop.f32.mrf.mxu0
  %v289 = vadd.f32 %v64, %v288
  %290 = vdwg.mxu0
  %291 = vmatpush.bf16.msra.mxu0 %v225
  %292 = vmatpush.bf16.msra.mxu0 %v224
  %293 = vmatpush.bf16.msra.mxu0 %v223
  %294 = vmatpush.bf16.msra.mxu0 %v222
  %295 = vmatpush.bf16.msra.mxu0 %v221
  %296 = vmatpush.bf16.msra.mxu0 %v220
  %297 = vmatpush.bf16.msra.mxu0 %v219
  %298 = vmatpush.bf16.msra.mxu0 %v218
  %299 = vmatmul.bf16.gmra.mxu0 %v115
  %v300 = vpop.f32.mrf.mxu0
  %v301 = vadd.f32 %v252, %v300
  %v302 = vpop.f32.mrf.mxu0
  %v303 = vadd.f32 %v254, %v302
  %304 = vmatmul.bf16.gmra.mxu0 %v117
  %v305 = vpop.f32.mrf.mxu0
  %v306 = vadd.f32 %v257, %v305
  %v307 = vpop.f32.mrf.mxu0
  %v308 = vadd.f32 %v259, %v307
  %309 = vmatmul.bf16.gmra.mxu0 %v119
  %v310 = vpop.f32.mrf.mxu0
  %v311 = vadd.f32 %v262, %v310
  %v312 = vpop.f32.mrf.mxu0
  %v313 = vadd.f32 %v264, %v312
  %314 = vmatmul.bf16.gmra.mxu0 %v121
  %v315 = vpop.f32.mrf.mxu0
  %v316 = vadd.f32 %v267, %v315
  %v317 = vpop.f32.mrf.mxu0
  %v318 = vadd.f32 %v269, %v317
  %319 = vmatmul.bf16.gmra.mxu0 %v123
  %v320 = vpop.f32.mrf.mxu0
  %v321 = vadd.f32 %v272, %v320
  %v322 = vpop.f32.mrf.mxu0
  %v323 = vadd.f32 %v274, %v322
  %324 = vmatmul.bf16.gmra.mxu0 %v125
  %v325 = vpop.f32.mrf.mxu0
  %v326 = vadd.f32 %v277, %v325
  %v327 = vpop.f32.mrf.mxu0
  %v328 = vadd.f32 %v279, %v327
  %329 = vmatmul.bf16.gmra.mxu0 %v127
  %v330 = vpop.f32.mrf.mxu0
  %v331 = vadd.f32 %v282, %v330
  %v332 = vpop.f32.mrf.mxu0
  %v333 = vadd.f32 %v284, %v332
  %334 = vmatmul.bf16.gmra.mxu0 %v129
  %v335 = vpop.f32.mrf.mxu0
  %v336 = vadd.f32 %v287, %v335
  %v337 = vpop.f32.mrf.mxu0
  %v338 = vadd.f32 %v289, %v337
  %339 = vdwg.mxu0
  %v340 = vmax.f32 %v301, 0.0
  %v341 = vmax.f32 %v303, 0.0
  %v342 = vmax.f32 %v306, 0.0
  %v343 = vmax.f32 %v308, 0.0
  %v344 = vmax.f32 %v311, 0.0
  %v345 = vmax.f32 %v313, 0.0
  %v346 = vmax.f32 %v316, 0.0
  %v347 = vmax.f32 %v318, 0.0
  %v348 = vmax.f32 %v321, 0.0
  %v349 = vmax.f32 %v323, 0.0
  %v350 = vmax.f32 %v326, 0.0
  %v351 = vmax.f32 %v328, 0.0
  %v352 = vmax.f32 %v331, 0.0
  %v353 = vmax.f32 %v333, 0.0
  %v354 = vmax.f32 %v336, 0.0
  %v355 = vmax.f32 %v338, 0.0
  %v356 = vpack.c.bf16 %v340, %v340
  %v357 = vpack.c.bf16 %v341, %v341
  %v358 = vpack.c.bf16 %v342, %v342
  %v359 = vpack.c.bf16 %v343, %v343
  %v360 = vpack.c.bf16 %v344, %v344
  %v361 = vpack.c.bf16 %v345, %v345
  %v362 = vpack.c.bf16 %v346, %v346
  %v363 = vpack.c.bf16 %v347, %v347
  %v364 = vpack.c.bf16 %v348, %v348
  %v365 = vpack.c.bf16 %v349, %v349
  %v366 = vpack.c.bf16 %v350, %v350
  %v367 = vpack.c.bf16 %v351, %v351
  %v368 = vpack.c.bf16 %v352, %v352
  %v369 = vpack.c.bf16 %v353, %v353
  %v370 = vpack.c.bf16 %v354, %v354
  %v371 = vpack.c.bf16 %v355, %v355
  %372 = vst [vmem:[%s3] sm:$0xf] %v356
  %373 = vst [vmem:[%s3 + $0x4] sm:$0xf] %v357
  %374 = vst [vmem:[%s3 + $0x8] sm:$0xf] %v358
  %375 = vst [vmem:[%s3 + $0xc] sm:$0xf] %v359
  %376 = vst [vmem:[%s3 + $0x10] sm:$0xf] %v360
  %377 = vst [vmem:[%s3 + $0x14] sm:$0xf] %v361
  %378 = vst [vmem:[%s3 + $0x18] sm:$0xf] %v362
  %379 = vst [vmem:[%s3 + $0x1c] sm:$0xf] %v363
  %380 = vst [vmem:[%s3 + $0x20] sm:$0xf] %v364
  %381 = vst [vmem:[%s3 + $0x24] sm:$0xf] %v365
  %382 = vst [vmem:[%s3 + $0x28] sm:$0xf] %v366
  %383 = vst [vmem:[%s3 + $0x2c] sm:$0xf] %v367
  %384 = vst [vmem:[%s3 + $0x30] sm:$0xf] %v368
  %385 = vst [vmem:[%s3 + $0x34] sm:$0xf] %v369
  %386 = vst [vmem:[%s3 + $0x38] sm:$0xf] %v370
  %387 = vst [vmem:[%s3 + $0x3c] sm:$0xf] %v371
  // Predicated region
  $region14: #{atari_forward.3} parent=0 // pred_check
    _
  $region15: #{atari_forward.3} parent=0 // pred_check_branch
    %389 = sbr.rel (0) target = $region17
  $region16: #{atari_forward.3} parent=0 // pred_region
    _
  $region17: #{atari_forward.3} parent=0 // pred_fallthru
    _
  // Predicated region
  $region18: #{atari_forward.3} parent=0 // pred_check
    _
  $region19: #{atari_forward.3} parent=0 // pred_check_branch
    %391 = sbr.rel (0) target = $region21
  $region20: #{atari_forward.3} parent=0 // pred_region
    _
  $region21: #{atari_forward.3} parent=0 // pred_fallthru
    _

// kernel: atari_forward.4
$region0: #{atari_forward.4}
  #allocation0 [shape = 'u32[]', space=smem, size = 0x4, offset = 0x4, fixed_abs, tag = 'smem constant byte address 0x4 - core index']
  #allocation1 [shape = 'u32[72,128]{1,0:T(1,128)}', space=vmem, size = 0x9000, scoped, tag = 'internal scratch']
  %s0 = inlined_call_operand.vmem [shape: bf16[18,2048], index: 0, kind: input, shape index: {}]
  %s1 = inlined_call_operand.vmem [shape: bf16[2048,128], index: 1, kind: input, shape index: {}]
  %s2 = inlined_call_operand.vmem [shape: f32[1,128], index: 2, kind: input, shape index: {}]
  %s3 = inlined_call_operand.vmem [shape: bf16[18,128], index: 3, kind: output, shape index: {}]
  %s4 = sld [smem:[#allocation0]]
  $region22: #{atari_forward.4} parent=0
    _
  %s6 = ssub.s32 1, %s4
  %s7 = scalar_select 0, %s6, %s4
  // Predicated region
  $region2: #{atari_forward.4} parent=0 // pred_check
    _
  $region3: #{atari_forward.4} parent=0 // pred_check_branch
    %9 = sbr.rel (0) target = $region5
  $region4: #{atari_forward.4} parent=0 // pred_region
    _
  $region5: #{atari_forward.4} parent=0 // pred_fallthru
    _
  // Predicated region
  $region6: #{atari_forward.4} parent=0 // pred_check
    _
  $region7: #{atari_forward.4} parent=0 // pred_check_branch
    %11 = sbr.rel (0) target = $region9
  $region8: #{atari_forward.4} parent=0 // pred_region
    _
  $region9: #{atari_forward.4} parent=0 // pred_fallthru
    _
  // Predicated region
  $region10: #{atari_forward.4} parent=0 // pred_check
    _
  $region11: #{atari_forward.4} parent=0 // pred_check_branch
    %13 = sbr.rel (0) target = $region13
  $region12: #{atari_forward.4} parent=0 // pred_region
    _
  $region13: #{atari_forward.4} parent=0 // pred_fallthru
    _
  %v14 = vld [vmem:[%s0] sm:$0xff]
  %v15 = vld [vmem:[%s0 + $0x8] sm:$0xff]
  %v16 = vld [vmem:[%s0 + $0x10] sm:$0xff]
  %v17 = vld [vmem:[%s0 + $0x18] sm:$0xff]
  %v18 = vld [vmem:[%s0 + $0x20] sm:$0xff]
  %v19 = vld [vmem:[%s0 + $0x28] sm:$0xff]
  %v20 = vld [vmem:[%s0 + $0x30] sm:$0xff]
  %v21 = vld [vmem:[%s0 + $0x38] sm:$0xff]
  %v22 = vld [vmem:[%s0 + $0x40] sm:$0xff]
  %v23 = vld [vmem:[%s0 + $0x48] sm:$0xff]
  %v24 = vld [vmem:[%s0 + $0x50] sm:$0xff]
  %v25 = vld [vmem:[%s0 + $0x58] sm:$0xff]
  %v26 = vld [vmem:[%s0 + $0x60] sm:$0xff]
  %v27 = vld [vmem:[%s0 + $0x68] sm:$0xff]
  %v28 = vld [vmem:[%s0 + $0x70] sm:$0xff]
  %v29 = vld [vmem:[%s0 + $0x78] sm:$0xff]
  %v30 = vld [vmem:[%s0 + $0x80] sm:$0x11]
  %v31 = vld [vmem:[%s0 + $0x88] sm:$0x11]
  %v32 = vld [vmem:[%s0 + $0x90] sm:$0x11]
  %v33 = vld [vmem:[%s0 + $0x98] sm:$0x11]
  %v34 = vld [vmem:[%s0 + $0xa0] sm:$0x11]
  %v35 = vld [vmem:[%s0 + $0xa8] sm:$0x11]
  %v36 = vld [vmem:[%s0 + $0xb0] sm:$0x11]
  %v37 = vld [vmem:[%s0 + $0xb8] sm:$0x11]
  %v38 = vld [vmem:[%s1] sm:$0xf]
  %v39 = vld [vmem:[%s1 + $0x4] sm:$0xf]
  %v40 = vld [vmem:[%s1 + $0x8] sm:$0xf]
  %v41 = vld [vmem:[%s1 + $0xc] sm:$0xf]
  %v42 = vld [vmem:[%s1 + $0x10] sm:$0xf]
  %v43 = vld [vmem:[%s1 + $0x14] sm:$0xf]
  %v44 = vld [vmem:[%s1 + $0x18] sm:$0xf]
  %v45 = vld [vmem:[%s1 + $0x1c] sm:$0xf]
  %v46 = vld [vmem:[%s1 + $0x20] sm:$0xf]
  %v47 = vld [vmem:[%s1 + $0x24] sm:$0xf]
  %v48 = vld [vmem:[%s1 + $0x28] sm:$0xf]
  %v49 = vld [vmem:[%s1 + $0x2c] sm:$0xf]
  %v50 = vld [vmem:[%s1 + $0x30] sm:$0xf]
  %v51 = vld [vmem:[%s1 + $0x34] sm:$0xf]
  %v52 = vld [vmem:[%s1 + $0x38] sm:$0xf]
  %v53 = vld [vmem:[%s1 + $0x3c] sm:$0xf]
  %v54 = vld [vmem:[%s1 + $0x40] sm:$0xf]
  %v55 = vld [vmem:[%s1 + $0x44] sm:$0xf]
  %v56 = vld [vmem:[%s1 + $0x48] sm:$0xf]
  %v57 = vld [vmem:[%s1 + $0x4c] sm:$0xf]
  %v58 = vld [vmem:[%s1 + $0x50] sm:$0xf]
  %v59 = vld [vmem:[%s1 + $0x54] sm:$0xf]
  %v60 = vld [vmem:[%s1 + $0x58] sm:$0xf]
  %v61 = vld [vmem:[%s1 + $0x5c] sm:$0xf]
  %v62 = vld [vmem:[%s1 + $0x60] sm:$0xf]
  %v63 = vld [vmem:[%s1 + $0x64] sm:$0xf]
  %v64 = vld [vmem:[%s1 + $0x68] sm:$0xf]
  %v65 = vld [vmem:[%s1 + $0x6c] sm:$0xf]
  %v66 = vld [vmem:[%s1 + $0x70] sm:$0xf]
  %v67 = vld [vmem:[%s1 + $0x74] sm:$0xf]
  %v68 = vld [vmem:[%s1 + $0x78] sm:$0xf]
  %v69 = vld [vmem:[%s1 + $0x7c] sm:$0xf]
  %v70 = vld [vmem:[%s1 + $0x80] sm:$0xf]
  %v71 = vld [vmem:[%s1 + $0x84] sm:$0xf]
  %v72 = vld [vmem:[%s1 + $0x88] sm:$0xf]
  %v73 = vld [vmem:[%s1 + $0x8c] sm:$0xf]
  %v74 = vld [vmem:[%s1 + $0x90] sm:$0xf]
  %v75 = vld [vmem:[%s1 + $0x94] sm:$0xf]
  %v76 = vld [vmem:[%s1 + $0x98] sm:$0xf]
  %v77 = vld [vmem:[%s1 + $0x9c] sm:$0xf]
  %v78 = vld [vmem:[%s1 + $0xa0] sm:$0xf]
  %v79 = vld [vmem:[%s1 + $0xa4] sm:$0xf]
  %v80 = vld [vmem:[%s1 + $0xa8] sm:$0xf]
  %v81 = vld [vmem:[%s1 + $0xac] sm:$0xf]
  %v82 = vld [vmem:[%s1 + $0xb0] sm:$0xf]
  %v83 = vld [vmem:[%s1 + $0xb4] sm:$0xf]
  %v84 = vld [vmem:[%s1 + $0xb8] sm:$0xf]
  %v85 = vld [vmem:[%s1 + $0xbc] sm:$0xf]
  %v86 = vld [vmem:[%s1 + $0xc0] sm:$0xf]
  %v87 = vld [vmem:[%s1 + $0xc4] sm:$0xf]
  %v88 = vld [vmem:[%s1 + $0xc8] sm:$0xf]
  %v89 = vld [vmem:[%s1 + $0xcc] sm:$0xf]
  %v90 = vld [vmem:[%s1 + $0xd0] sm:$0xf]
  %v91 = vld [vmem:[%s1 + $0xd4] sm:$0xf]
  %v92 = vld [vmem:[%s1 + $0xd8] sm:$0xf]
  %v93 = vld [vmem:[%s1 + $0xdc] sm:$0xf]
  %v94 = vld [vmem:[%s1 + $0xe0] sm:$0xf]
  %v95 = vld [vmem:[%s1 + $0xe4] sm:$0xf]
  %v96 = vld [vmem:[%s1 + $0xe8] sm:$0xf]
  %v97 = vld [vmem:[%s1 + $0xec] sm:$0xf]
  %v98 = vld [vmem:[%s1 + $0xf0] sm:$0xf]
  %v99 = vld [vmem:[%s1 + $0xf4] sm:$0xf]
  %v100 = vld [vmem:[%s1 + $0xf8] sm:$0xf]
  %v101 = vld [vmem:[%s1 + $0xfc] sm:$0xf]
  %v102 = vld [vmem:[%s1 + $0x100] sm:$0xf]
  %v103 = vld [vmem:[%s1 + $0x104] sm:$0xf]
  %v104 = vld [vmem:[%s1 + $0x108] sm:$0xf]
  %v105 = vld [vmem:[%s1 + $0x10c] sm:$0xf]
  %v106 = vld [vmem:[%s1 + $0x110] sm:$0xf]
  %v107 = vld [vmem:[%s1 + $0x114] sm:$0xf]
  %v108 = vld [vmem:[%s1 + $0x118] sm:$0xf]
  %v109 = vld [vmem:[%s1 + $0x11c] sm:$0xf]
  %v110 = vld [vmem:[%s1 + $0x120] sm:$0xf]
  %v111 = vld [vmem:[%s1 + $0x124] sm:$0xf]
  %v112 = vld [vmem:[%s1 + $0x128] sm:$0xf]
  %v113 = vld [vmem:[%s1 + $0x12c] sm:$0xf]
  %v114 = vld [vmem:[%s1 + $0x130] sm:$0xf]
  %v115 = vld [vmem:[%s1 + $0x134] sm:$0xf]
  %v116 = vld [vmem:[%s1 + $0x138] sm:$0xf]
  %v117 = vld [vmem:[%s1 + $0x13c] sm:$0xf]
  %v118 = vld [vmem:[%s1 + $0x140] sm:$0xf]
  %v119 = vld [vmem:[%s1 + $0x144] sm:$0xf]
  %v120 = vld [vmem:[%s1 + $0x148] sm:$0xf]
  %v121 = vld [vmem:[%s1 + $0x14c] sm:$0xf]
  %v122 = vld [vmem:[%s1 + $0x150] sm:$0xf]
  %v123 = vld [vmem:[%s1 + $0x154] sm:$0xf]
  %v124 = vld [vmem:[%s1 + $0x158] sm:$0xf]
  %v125 = vld [vmem:[%s1 + $0x15c] sm:$0xf]
  %v126 = vld [vmem:[%s1 + $0x160] sm:$0xf]
  %v127 = vld [vmem:[%s1 + $0x164] sm:$0xf]
  %v128 = vld [vmem:[%s1 + $0x168] sm:$0xf]
  %v129 = vld [vmem:[%s1 + $0x16c] sm:$0xf]
  %v130 = vld [vmem:[%s1 + $0x170] sm:$0xf]
  %v131 = vld [vmem:[%s1 + $0x174] sm:$0xf]
  %v132 = vld [vmem:[%s1 + $0x178] sm:$0xf]
  %v133 = vld [vmem:[%s1 + $0x17c] sm:$0xf]
  %v134 = vld [vmem:[%s1 + $0x180] sm:$0xf]
  %v135 = vld [vmem:[%s1 + $0x184] sm:$0xf]
  %v136 = vld [vmem:[%s1 + $0x188] sm:$0xf]
  %v137 = vld [vmem:[%s1 + $0x18c] sm:$0xf]
  %v138 = vld [vmem:[%s1 + $0x190] sm:$0xf]
  %v139 = vld [vmem:[%s1 + $0x194] sm:$0xf]
  %v140 = vld [vmem:[%s1 + $0x198] sm:$0xf]
  %v141 = vld [vmem:[%s1 + $0x19c] sm:$0xf]
  %v142 = vld [vmem:[%s1 + $0x1a0] sm:$0xf]
  %v143 = vld [vmem:[%s1 + $0x1a4] sm:$0xf]
  %v144 = vld [vmem:[%s1 + $0x1a8] sm:$0xf]
  %v145 = vld [vmem:[%s1 + $0x1ac] sm:$0xf]
  %v146 = vld [vmem:[%s1 + $0x1b0] sm:$0xf]
  %v147 = vld [vmem:[%s1 + $0x1b4] sm:$0xf]
  %v148 = vld [vmem:[%s1 + $0x1b8] sm:$0xf]
  %v149 = vld [vmem:[%s1 + $0x1bc] sm:$0xf]
  %v150 = vld [vmem:[%s1 + $0x1c0] sm:$0xf]
  %v151 = vld [vmem:[%s1 + $0x1c4] sm:$0xf]
  %v152 = vld [vmem:[%s1 + $0x1c8] sm:$0xf]
  %v153 = vld [vmem:[%s1 + $0x1cc] sm:$0xf]
  %v154 = vld [vmem:[%s1 + $0x1d0] sm:$0xf]
  %v155 = vld [vmem:[%s1 + $0x1d4] sm:$0xf]
  %v156 = vld [vmem:[%s1 + $0x1d8] sm:$0xf]
  %v157 = vld [vmem:[%s1 + $0x1dc] sm:$0xf]
  %v158 = vld [vmem:[%s1 + $0x1e0] sm:$0xf]
  %v159 = vld [vmem:[%s1 + $0x1e4] sm:$0xf]
  %v160 = vld [vmem:[%s1 + $0x1e8] sm:$0xf]
  %v161 = vld [vmem:[%s1 + $0x1ec] sm:$0xf]
  %v162 = vld [vmem:[%s1 + $0x1f0] sm:$0xf]
  %v163 = vld [vmem:[%s1 + $0x1f4] sm:$0xf]
  %v164 = vld [vmem:[%s1 + $0x1f8] sm:$0xf]
  %v165 = vld [vmem:[%s1 + $0x1fc] sm:$0xf]
  %v166 = vld [vmem:[%s1 + $0x200] sm:$0xf]
  %v167 = vld [vmem:[%s1 + $0x204] sm:$0xf]
  %v168 = vld [vmem:[%s1 + $0x208] sm:$0xf]
  %v169 = vld [vmem:[%s1 + $0x20c] sm:$0xf]
  %v170 = vld [vmem:[%s1 + $0x210] sm:$0xf]
  %v171 = vld [vmem:[%s1 + $0x214] sm:$0xf]
  %v172 = vld [vmem:[%s1 + $0x218] sm:$0xf]
  %v173 = vld [vmem:[%s1 + $0x21c] sm:$0xf]
  %v174 = vld [vmem:[%s1 + $0x220] sm:$0xf]
  %v175 = vld [vmem:[%s1 + $0x224] sm:$0xf]
  %v176 = vld [vmem:[%s1 + $0x228] sm:$0xf]
  %v177 = vld [vmem:[%s1 + $0x22c] sm:$0xf]
  %v178 = vld [vmem:[%s1 + $0x230] sm:$0xf]
  %v179 = vld [vmem:[%s1 + $0x234] sm:$0xf]
  %v180 = vld [vmem:[%s1 + $0x238] sm:$0xf]
  %v181 = vld [vmem:[%s1 + $0x23c] sm:$0xf]
  %v182 = vld [vmem:[%s1 + $0x240] sm:$0xf]
  %v183 = vld [vmem:[%s1 + $0x244] sm:$0xf]
  %v184 = vld [vmem:[%s1 + $0x248] sm:$0xf]
  %v185 = vld [vmem:[%s1 + $0x24c] sm:$0xf]
  %v186 = vld [vmem:[%s1 + $0x250] sm:$0xf]
  %v187 = vld [vmem:[%s1 + $0x254] sm:$0xf]
  %v188 = vld [vmem:[%s1 + $0x258] sm:$0xf]
  %v189 = vld [vmem:[%s1 + $0x25c] sm:$0xf]
  %v190 = vld [vmem:[%s1 + $0x260] sm:$0xf]
  %v191 = vld [vmem:[%s1 + $0x264] sm:$0xf]
  %v192 = vld [vmem:[%s1 + $0x268] sm:$0xf]
  %v193 = vld [vmem:[%s1 + $0x26c] sm:$0xf]
  %v194 = vld [vmem:[%s1 + $0x270] sm:$0xf]
  %v195 = vld [vmem:[%s1 + $0x274] sm:$0xf]
  %v196 = vld [vmem:[%s1 + $0x278] sm:$0xf]
  %v197 = vld [vmem:[%s1 + $0x27c] sm:$0xf]
  %v198 = vld [vmem:[%s1 + $0x280] sm:$0xf]
  %v199 = vld [vmem:[%s1 + $0x284] sm:$0xf]
  %v200 = vld [vmem:[%s1 + $0x288] sm:$0xf]
  %v201 = vld [vmem:[%s1 + $0x28c] sm:$0xf]
  %v202 = vld [vmem:[%s1 + $0x290] sm:$0xf]
  %v203 = vld [vmem:[%s1 + $0x294] sm:$0xf]
  %v204 = vld [vmem:[%s1 + $0x298] sm:$0xf]
  %v205 = vld [vmem:[%s1 + $0x29c] sm:$0xf]
  %v206 = vld [vmem:[%s1 + $0x2a0] sm:$0xf]
  %v207 = vld [vmem:[%s1 + $0x2a4] sm:$0xf]
  %v208 = vld [vmem:[%s1 + $0x2a8] sm:$0xf]
  %v209 = vld [vmem:[%s1 + $0x2ac] sm:$0xf]
  %v210 = vld [vmem:[%s1 + $0x2b0] sm:$0xf]
  %v211 = vld [vmem:[%s1 + $0x2b4] sm:$0xf]
  %v212 = vld [vmem:[%s1 + $0x2b8] sm:$0xf]
  %v213 = vld [vmem:[%s1 + $0x2bc] sm:$0xf]
  %v214 = vld [vmem:[%s1 + $0x2c0] sm:$0xf]
  %v215 = vld [vmem:[%s1 + $0x2c4] sm:$0xf]
  %v216 = vld [vmem:[%s1 + $0x2c8] sm:$0xf]
  %v217 = vld [vmem:[%s1 + $0x2cc] sm:$0xf]
  %v218 = vld [vmem:[%s1 + $0x2d0] sm:$0xf]
  %v219 = vld [vmem:[%s1 + $0x2d4] sm:$0xf]
  %v220 = vld [vmem:[%s1 + $0x2d8] sm:$0xf]
  %v221 = vld [vmem:[%s1 + $0x2dc] sm:$0xf]
  %v222 = vld [vmem:[%s1 + $0x2e0] sm:$0xf]
  %v223 = vld [vmem:[%s1 + $0x2e4] sm:$0xf]
  %v224 = vld [vmem:[%s1 + $0x2e8] sm:$0xf]
  %v225 = vld [vmem:[%s1 + $0x2ec] sm:$0xf]
  %v226 = vld [vmem:[%s1 + $0x2f0] sm:$0xf]
  %v227 = vld [vmem:[%s1 + $0x2f4] sm:$0xf]
  %v228 = vld [vmem:[%s1 + $0x2f8] sm:$0xf]
  %v229 = vld [vmem:[%s1 + $0x2fc] sm:$0xf]
  %v230 = vld [vmem:[%s1 + $0x300] sm:$0xf]
  %v231 = vld [vmem:[%s1 + $0x304] sm:$0xf]
  %v232 = vld [vmem:[%s1 + $0x308] sm:$0xf]
  %v233 = vld [vmem:[%s1 + $0x30c] sm:$0xf]
  %v234 = vld [vmem:[%s1 + $0x310] sm:$0xf]
  %v235 = vld [vmem:[%s1 + $0x314] sm:$0xf]
  %v236 = vld [vmem:[%s1 + $0x318] sm:$0xf]
  %v237 = vld [vmem:[%s1 + $0x31c] sm:$0xf]
  %v238 = vld [vmem:[%s1 + $0x320] sm:$0xf]
  %v239 = vld [vmem:[%s1 + $0x324] sm:$0xf]
  %v240 = vld [vmem:[%s1 + $0x328] sm:$0xf]
  %v241 = vld [vmem:[%s1 + $0x32c] sm:$0xf]
  %v242 = vld [vmem:[%s1 + $0x330] sm:$0xf]
  %v243 = vld [vmem:[%s1 + $0x334] sm:$0xf]
  %v244 = vld [vmem:[%s1 + $0x338] sm:$0xf]
  %v245 = vld [vmem:[%s1 + $0x33c] sm:$0xf]
  %v246 = vld [vmem:[%s1 + $0x340] sm:$0xf]
  %v247 = vld [vmem:[%s1 + $0x344] sm:$0xf]
  %v248 = vld [vmem:[%s1 + $0x348] sm:$0xf]
  %v249 = vld [vmem:[%s1 + $0x34c] sm:$0xf]
  %v250 = vld [vmem:[%s1 + $0x350] sm:$0xf]
  %v251 = vld [vmem:[%s1 + $0x354] sm:$0xf]
  %v252 = vld [vmem:[%s1 + $0x358] sm:$0xf]
  %v253 = vld [vmem:[%s1 + $0x35c] sm:$0xf]
  %v254 = vld [vmem:[%s1 + $0x360] sm:$0xf]
  %v255 = vld [vmem:[%s1 + $0x364] sm:$0xf]
  %v256 = vld [vmem:[%s1 + $0x368] sm:$0xf]
  %v257 = vld [vmem:[%s1 + $0x36c] sm:$0xf]
  %v258 = vld [vmem:[%s1 + $0x370] sm:$0xf]
  %v259 = vld [vmem:[%s1 + $0x374] sm:$0xf]
  %v260 = vld [vmem:[%s1 + $0x378] sm:$0xf]
  %v261 = vld [vmem:[%s1 + $0x37c] sm:$0xf]
  %v262 = vld [vmem:[%s1 + $0x380] sm:$0xf]
  %v263 = vld [vmem:[%s1 + $0x384] sm:$0xf]
  %v264 = vld [vmem:[%s1 + $0x388] sm:$0xf]
  %v265 = vld [vmem:[%s1 + $0x38c] sm:$0xf]
  %v266 = vld [vmem:[%s1 + $0x390] sm:$0xf]
  %v267 = vld [vmem:[%s1 + $0x394] sm:$0xf]
  %v268 = vld [vmem:[%s1 + $0x398] sm:$0xf]
  %v269 = vld [vmem:[%s1 + $0x39c] sm:$0xf]
  %v270 = vld [vmem:[%s1 + $0x3a0] sm:$0xf]
  %v271 = vld [vmem:[%s1 + $0x3a4] sm:$0xf]
  %v272 = vld [vmem:[%s1 + $0x3a8] sm:$0xf]
  %v273 = vld [vmem:[%s1 + $0x3ac] sm:$0xf]
  %v274 = vld [vmem:[%s1 + $0x3b0] sm:$0xf]
  %v275 = vld [vmem:[%s1 + $0x3b4] sm:$0xf]
  %v276 = vld [vmem:[%s1 + $0x3b8] sm:$0xf]
  %v277 = vld [vmem:[%s1 + $0x3bc] sm:$0xf]
  %v278 = vld [vmem:[%s1 + $0x3c0] sm:$0xf]
  %v279 = vld [vmem:[%s1 + $0x3c4] sm:$0xf]
  %v280 = vld [vmem:[%s1 + $0x3c8] sm:$0xf]
  %v281 = vld [vmem:[%s1 + $0x3cc] sm:$0xf]
  %v282 = vld [vmem:[%s1 + $0x3d0] sm:$0xf]
  %v283 = vld [vmem:[%s1 + $0x3d4] sm:$0xf]
  %v284 = vld [vmem:[%s1 + $0x3d8] sm:$0xf]
  %v285 = vld [vmem:[%s1 + $0x3dc] sm:$0xf]
  %v286 = vld [vmem:[%s1 + $0x3e0] sm:$0xf]
  %v287 = vld [vmem:[%s1 + $0x3e4] sm:$0xf]
  %v288 = vld [vmem:[%s1 + $0x3e8] sm:$0xf]
  %v289 = vld [vmem:[%s1 + $0x3ec] sm:$0xf]
  %v290 = vld [vmem:[%s1 + $0x3f0] sm:$0xf]
  %v291 = vld [vmem:[%s1 + $0x3f4] sm:$0xf]
  %v292 = vld [vmem:[%s1 + $0x3f8] sm:$0xf]
  %v293 = vld [vmem:[%s1 + $0x3fc] sm:$0xf]
  %v294 = vld [vmem:[%s2] sm:$0x1]
  %v296 = vperm.slane %v294, 0
  %v322 = vunpack.c.l.b16 %v14
  %v323 = vunpack.c.h.b16 %v14
  %v324 = vunpack.c.l.b16 %v15
  %v325 = vunpack.c.h.b16 %v15
  %v326 = vunpack.c.l.b16 %v16
  %v327 = vunpack.c.h.b16 %v16
  %v328 = vunpack.c.l.b16 %v17
  %v329 = vunpack.c.h.b16 %v17
  %v330 = vunpack.c.l.b16 %v18
  %v331 = vunpack.c.h.b16 %v18
  %v332 = vunpack.c.l.b16 %v19
  %v333 = vunpack.c.h.b16 %v19
  %v334 = vunpack.c.l.b16 %v20
  %v335 = vunpack.c.h.b16 %v20
  %v336 = vunpack.c.l.b16 %v21
  %v337 = vunpack.c.h.b16 %v21
  %v338 = vunpack.c.l.b16 %v22
  %v339 = vunpack.c.h.b16 %v22
  %v340 = vunpack.c.l.b16 %v23
  %v341 = vunpack.c.h.b16 %v23
  %v342 = vunpack.c.l.b16 %v24
  %v343 = vunpack.c.h.b16 %v24
  %v344 = vunpack.c.l.b16 %v25
  %v345 = vunpack.c.h.b16 %v25
  %v346 = vunpack.c.l.b16 %v26
  %v347 = vunpack.c.h.b16 %v26
  %v348 = vunpack.c.l.b16 %v27
  %v349 = vunpack.c.h.b16 %v27
  %v350 = vunpack.c.l.b16 %v28
  %v351 = vunpack.c.h.b16 %v28
  %v352 = vunpack.c.l.b16 %v29
  %v353 = vunpack.c.h.b16 %v29
  %v354 = vunpack.c.l.b16 %v30
  %v355 = vunpack.c.h.b16 %v30
  %v356 = vunpack.c.l.b16 %v31
  %v357 = vunpack.c.h.b16 %v31
  %v358 = vunpack.c.l.b16 %v32
  %v359 = vunpack.c.h.b16 %v32
  %v360 = vunpack.c.l.b16 %v33
  %v361 = vunpack.c.h.b16 %v33
  %v362 = vunpack.c.l.b16 %v34
  %v363 = vunpack.c.h.b16 %v34
  %v364 = vunpack.c.l.b16 %v35
  %v365 = vunpack.c.h.b16 %v35
  %v366 = vunpack.c.l.b16 %v36
  %v367 = vunpack.c.h.b16 %v36
  %v368 = vunpack.c.l.b16 %v37
  %v369 = vunpack.c.h.b16 %v37
  %v370 = vpack.c.b16 %v338, %v322
  %v371 = vpack.c.b16 %v339, %v323
  %v372 = vpack.c.b16 %v340, %v324
  %v373 = vpack.c.b16 %v341, %v325
  %v374 = vpack.c.b16 %v342, %v326
  %v375 = vpack.c.b16 %v343, %v327
  %v376 = vpack.c.b16 %v344, %v328
  %v377 = vpack.c.b16 %v345, %v329
  %v378 = vpack.c.b16 %v346, %v330
  %v379 = vpack.c.b16 %v347, %v331
  %v380 = vpack.c.b16 %v348, %v332
  %v381 = vpack.c.b16 %v349, %v333
  %v382 = vpack.c.b16 %v350, %v334
  %v383 = vpack.c.b16 %v351, %v335
  %v384 = vpack.c.b16 %v352, %v336
  %v385 = vpack.c.b16 %v353, %v337
  %v386 = vpack.c.b16 %v354, %v354
  %v387 = vpack.c.b16 %v355, %v355
  %v388 = vpack.c.b16 %v356, %v356
  %v389 = vpack.c.b16 %v357, %v357
  %v390 = vpack.c.b16 %v358, %v358
  %v391 = vpack.c.b16 %v359, %v359
  %v392 = vpack.c.b16 %v360, %v360
  %v393 = vpack.c.b16 %v361, %v361
  %v394 = vpack.c.b16 %v362, %v362
  %v395 = vpack.c.b16 %v363, %v363
  %v396 = vpack.c.b16 %v364, %v364
  %v397 = vpack.c.b16 %v365, %v365
  %v398 = vpack.c.b16 %v366, %v366
  %v399 = vpack.c.b16 %v367, %v367
  %v400 = vpack.c.b16 %v368, %v368
  %v401 = vpack.c.b16 %v369, %v369
  %v690 = vunpack.c.l.b16 %v38
  %v691 = vunpack.c.l.b16 %v39
  %v692 = vunpack.c.l.b16 %v40
  %v693 = vunpack.c.l.b16 %v41
  %v694 = vunpack.c.l.b16 %v42
  %v695 = vunpack.c.l.b16 %v43
  %v696 = vunpack.c.l.b16 %v44
  %v697 = vunpack.c.l.b16 %v45
  %v698 = vunpack.c.l.b16 %v46
  %v699 = vunpack.c.l.b16 %v47
  %v700 = vunpack.c.l.b16 %v48
  %v701 = vunpack.c.l.b16 %v49
  %v702 = vunpack.c.l.b16 %v50
  %v703 = vunpack.c.l.b16 %v51
  %v704 = vunpack.c.l.b16 %v52
  %v705 = vunpack.c.l.b16 %v53
  %v706 = vunpack.c.l.b16 %v54
  %v707 = vunpack.c.l.b16 %v55
  %v708 = vunpack.c.l.b16 %v56
  %v709 = vunpack.c.l.b16 %v57
  %v710 = vunpack.c.l.b16 %v58
  %v711 = vunpack.c.l.b16 %v59
  %v712 = vunpack.c.l.b16 %v60
  %v713 = vunpack.c.l.b16 %v61
  %v714 = vunpack.c.l.b16 %v62
  %v715 = vunpack.c.l.b16 %v63
  %v716 = vunpack.c.l.b16 %v64
  %v717 = vunpack.c.l.b16 %v65
  %v718 = vunpack.c.l.b16 %v66
  %v719 = vunpack.c.l.b16 %v67
  %v720 = vunpack.c.l.b16 %v68
  %v721 = vunpack.c.l.b16 %v69
  %v722 = vunpack.c.l.b16 %v70
  %v723 = vunpack.c.l.b16 %v71
  %v724 = vunpack.c.l.b16 %v72
  %v725 = vunpack.c.l.b16 %v73
  %v726 = vunpack.c.l.b16 %v74
  %v727 = vunpack.c.l.b16 %v75
  %v728 = vunpack.c.l.b16 %v76
  %v729 = vunpack.c.l.b16 %v77
  %v730 = vunpack.c.l.b16 %v78
  %v731 = vunpack.c.l.b16 %v79
  %v732 = vunpack.c.l.b16 %v80
  %v733 = vunpack.c.l.b16 %v81
  %v734 = vunpack.c.l.b16 %v82
  %v735 = vunpack.c.l.b16 %v83
  %v736 = vunpack.c.l.b16 %v84
  %v737 = vunpack.c.l.b16 %v85
  %v738 = vunpack.c.l.b16 %v86
  %v739 = vunpack.c.l.b16 %v87
  %v740 = vunpack.c.l.b16 %v88
  %v741 = vunpack.c.l.b16 %v89
  %v742 = vunpack.c.l.b16 %v90
  %v743 = vunpack.c.l.b16 %v91
  %v744 = vunpack.c.l.b16 %v92
  %v745 = vunpack.c.l.b16 %v93
  %v746 = vunpack.c.l.b16 %v94
  %v747 = vunpack.c.l.b16 %v95
  %v748 = vunpack.c.l.b16 %v96
  %v749 = vunpack.c.l.b16 %v97
  %v750 = vunpack.c.l.b16 %v98
  %v751 = vunpack.c.l.b16 %v99
  %v752 = vunpack.c.l.b16 %v100
  %v753 = vunpack.c.l.b16 %v101
  %v754 = vunpack.c.l.b16 %v102
  %v755 = vunpack.c.l.b16 %v103
  %v756 = vunpack.c.l.b16 %v104
  %v757 = vunpack.c.l.b16 %v105
  %v758 = vunpack.c.l.b16 %v106
  %v759 = vunpack.c.l.b16 %v107
  %v760 = vunpack.c.l.b16 %v108
  %v761 = vunpack.c.l.b16 %v109
  %v762 = vunpack.c.l.b16 %v110
  %v763 = vunpack.c.l.b16 %v111
  %v764 = vunpack.c.l.b16 %v112
  %v765 = vunpack.c.l.b16 %v113
  %v766 = vunpack.c.l.b16 %v114
  %v767 = vunpack.c.l.b16 %v115
  %v768 = vunpack.c.l.b16 %v116
  %v769 = vunpack.c.l.b16 %v117
  %v770 = vunpack.c.l.b16 %v118
  %v771 = vunpack.c.l.b16 %v119
  %v772 = vunpack.c.l.b16 %v120
  %v773 = vunpack.c.l.b16 %v121
  %v774 = vunpack.c.l.b16 %v122
  %v775 = vunpack.c.l.b16 %v123
  %v776 = vunpack.c.l.b16 %v124
  %v777 = vunpack.c.l.b16 %v125
  %v778 = vunpack.c.l.b16 %v126
  %v779 = vunpack.c.l.b16 %v127
  %v780 = vunpack.c.l.b16 %v128
  %v781 = vunpack.c.l.b16 %v129
  %v782 = vunpack.c.l.b16 %v130
  %v783 = vunpack.c.l.b16 %v131
  %v784 = vunpack.c.l.b16 %v132
  %v785 = vunpack.c.l.b16 %v133
  %v786 = vunpack.c.l.b16 %v134
  %v787 = vunpack.c.l.b16 %v135
  %v788 = vunpack.c.l.b16 %v136
  %v789 = vunpack.c.l.b16 %v137
  %v790 = vunpack.c.l.b16 %v138
  %v791 = vunpack.c.l.b16 %v139
  %v792 = vunpack.c.l.b16 %v140
  %v793 = vunpack.c.l.b16 %v141
  %v794 = vunpack.c.l.b16 %v142
  %v795 = vunpack.c.l.b16 %v143
  %v796 = vunpack.c.l.b16 %v144
  %v797 = vunpack.c.l.b16 %v145
  %v798 = vunpack.c.l.b16 %v146
  %v799 = vunpack.c.l.b16 %v147
  %v800 = vunpack.c.l.b16 %v148
  %v801 = vunpack.c.l.b16 %v149
  %v802 = vunpack.c.l.b16 %v150
  %v803 = vunpack.c.l.b16 %v151
  %v804 = vunpack.c.l.b16 %v152
  %v805 = vunpack.c.l.b16 %v153
  %v806 = vunpack.c.l.b16 %v154
  %v807 = vunpack.c.l.b16 %v155
  %v808 = vunpack.c.l.b16 %v156
  %v809 = vunpack.c.l.b16 %v157
  %v810 = vunpack.c.l.b16 %v158
  %v811 = vunpack.c.l.b16 %v159
  %v812 = vunpack.c.l.b16 %v160
  %v813 = vunpack.c.l.b16 %v161
  %v814 = vunpack.c.l.b16 %v162
  %v815 = vunpack.c.l.b16 %v163
  %v816 = vunpack.c.l.b16 %v164
  %v817 = vunpack.c.l.b16 %v165
  %v818 = vunpack.c.l.b16 %v166
  %v819 = vunpack.c.l.b16 %v167
  %v820 = vunpack.c.l.b16 %v168
  %v821 = vunpack.c.l.b16 %v169
  %v822 = vunpack.c.l.b16 %v170
  %v823 = vunpack.c.l.b16 %v171
  %v824 = vunpack.c.l.b16 %v172
  %v825 = vunpack.c.l.b16 %v173
  %v826 = vunpack.c.l.b16 %v174
  %v827 = vunpack.c.l.b16 %v175
  %v828 = vunpack.c.l.b16 %v176
  %v829 = vunpack.c.l.b16 %v177
  %v830 = vunpack.c.l.b16 %v178
  %v831 = vunpack.c.l.b16 %v179
  %v832 = vunpack.c.l.b16 %v180
  %v833 = vunpack.c.l.b16 %v181
  %v834 = vunpack.c.l.b16 %v182
  %v835 = vunpack.c.l.b16 %v183
  %v836 = vunpack.c.l.b16 %v184
  %v837 = vunpack.c.l.b16 %v185
  %v838 = vunpack.c.l.b16 %v186
  %v839 = vunpack.c.l.b16 %v187
  %v840 = vunpack.c.l.b16 %v188
  %v841 = vunpack.c.l.b16 %v189
  %v842 = vunpack.c.l.b16 %v190
  %v843 = vunpack.c.l.b16 %v191
  %v844 = vunpack.c.l.b16 %v192
  %v845 = vunpack.c.l.b16 %v193
  %v846 = vunpack.c.l.b16 %v194
  %v847 = vunpack.c.l.b16 %v195
  %v848 = vunpack.c.l.b16 %v196
  %v849 = vunpack.c.l.b16 %v197
  %v850 = vunpack.c.l.b16 %v198
  %v851 = vunpack.c.l.b16 %v199
  %v852 = vunpack.c.l.b16 %v200
  %v853 = vunpack.c.l.b16 %v201
  %v854 = vunpack.c.l.b16 %v202
  %v855 = vunpack.c.l.b16 %v203
  %v856 = vunpack.c.l.b16 %v204
  %v857 = vunpack.c.l.b16 %v205
  %v858 = vunpack.c.l.b16 %v206
  %v859 = vunpack.c.l.b16 %v207
  %v860 = vunpack.c.l.b16 %v208
  %v861 = vunpack.c.l.b16 %v209
  %v862 = vunpack.c.l.b16 %v210
  %v863 = vunpack.c.l.b16 %v211
  %v864 = vunpack.c.l.b16 %v212
  %v865 = vunpack.c.l.b16 %v213
  %v866 = vunpack.c.l.b16 %v214
  %v867 = vunpack.c.l.b16 %v215
  %v868 = vunpack.c.l.b16 %v216
  %v869 = vunpack.c.l.b16 %v217
  %v870 = vunpack.c.l.b16 %v218
  %v871 = vunpack.c.l.b16 %v219
  %v872 = vunpack.c.l.b16 %v220
  %v873 = vunpack.c.l.b16 %v221
  %v874 = vunpack.c.l.b16 %v222
  %v875 = vunpack.c.l.b16 %v223
  %v876 = vunpack.c.l.b16 %v224
  %v877 = vunpack.c.l.b16 %v225
  %v878 = vunpack.c.l.b16 %v226
  %v879 = vunpack.c.l.b16 %v227
  %v880 = vunpack.c.l.b16 %v228
  %v881 = vunpack.c.l.b16 %v229
  %v882 = vunpack.c.l.b16 %v230
  %v883 = vunpack.c.l.b16 %v231
  %v884 = vunpack.c.l.b16 %v232
  %v885 = vunpack.c.l.b16 %v233
  %v886 = vunpack.c.l.b16 %v234
  %v887 = vunpack.c.l.b16 %v235
  %v888 = vunpack.c.l.b16 %v236
  %v889 = vunpack.c.l.b16 %v237
  %v890 = vunpack.c.l.b16 %v238
  %v891 = vunpack.c.l.b16 %v239
  %v892 = vunpack.c.l.b16 %v240
  %v893 = vunpack.c.l.b16 %v241
  %v894 = vunpack.c.l.b16 %v242
  %v895 = vunpack.c.l.b16 %v243
  %v896 = vunpack.c.l.b16 %v244
  %v897 = vunpack.c.l.b16 %v245
  %v898 = vunpack.c.l.b16 %v246
  %v899 = vunpack.c.l.b16 %v247
  %v900 = vunpack.c.l.b16 %v248
  %v901 = vunpack.c.l.b16 %v249
  %v902 = vunpack.c.l.b16 %v250
  %v903 = vunpack.c.l.b16 %v251
  %v904 = vunpack.c.l.b16 %v252
  %v905 = vunpack.c.l.b16 %v253
  %v906 = vunpack.c.l.b16 %v254
  %v907 = vunpack.c.l.b16 %v255
  %v908 = vunpack.c.l.b16 %v256
  %v909 = vunpack.c.l.b16 %v257
  %v910 = vunpack.c.l.b16 %v258
  %v911 = vunpack.c.l.b16 %v259
  %v912 = vunpack.c.l.b16 %v260
  %v913 = vunpack.c.l.b16 %v261
  %v914 = vunpack.c.l.b16 %v262
  %v915 = vunpack.c.l.b16 %v263
  %v916 = vunpack.c.l.b16 %v264
  %v917 = vunpack.c.l.b16 %v265
  %v918 = vunpack.c.l.b16 %v266
  %v919 = vunpack.c.l.b16 %v267
  %v920 = vunpack.c.l.b16 %v268
  %v921 = vunpack.c.l.b16 %v269
  %v922 = vunpack.c.l.b16 %v270
  %v923 = vunpack.c.l.b16 %v271
  %v924 = vunpack.c.l.b16 %v272
  %v925 = vunpack.c.l.b16 %v273
  %v926 = vunpack.c.l.b16 %v274
  %v927 = vunpack.c.l.b16 %v275
  %v928 = vunpack.c.l.b16 %v276
  %v929 = vunpack.c.l.b16 %v277
  %v930 = vunpack.c.l.b16 %v278
  %v931 = vunpack.c.l.b16 %v279
  %v932 = vunpack.c.l.b16 %v280
  %v933 = vunpack.c.l.b16 %v281
  %v934 = vunpack.c.l.b16 %v282
  %v935 = vunpack.c.l.b16 %v283
  %v936 = vunpack.c.l.b16 %v284
  %v937 = vunpack.c.l.b16 %v285
  %v938 = vunpack.c.l.b16 %v286
  %v939 = vunpack.c.l.b16 %v287
  %v940 = vunpack.c.l.b16 %v288
  %v941 = vunpack.c.l.b16 %v289
  %v942 = vunpack.c.l.b16 %v290
  %v943 = vunpack.c.l.b16 %v291
  %v944 = vunpack.c.l.b16 %v292
  %v945 = vunpack.c.l.b16 %v293
  %v946 = vpack.c.b16 %v691, %v690
  %v947 = vpack.c.b16 %v693, %v692
  %v948 = vpack.c.b16 %v695, %v694
  %v949 = vpack.c.b16 %v697, %v696
  %v950 = vpack.c.b16 %v699, %v698
  %v951 = vpack.c.b16 %v701, %v700
  %v952 = vpack.c.b16 %v703, %v702
  %v953 = vpack.c.b16 %v705, %v704
  %v954 = vpack.c.b16 %v707, %v706
  %v955 = vpack.c.b16 %v709, %v708
  %v956 = vpack.c.b16 %v711, %v710
  %v957 = vpack.c.b16 %v713, %v712
  %v958 = vpack.c.b16 %v715, %v714
  %v959 = vpack.c.b16 %v717, %v716
  %v960 = vpack.c.b16 %v719, %v718
  %v961 = vpack.c.b16 %v721, %v720
  %v962 = vpack.c.b16 %v723, %v722
  %v963 = vpack.c.b16 %v725, %v724
  %v964 = vpack.c.b16 %v727, %v726
  %v965 = vpack.c.b16 %v729, %v728
  %v966 = vpack.c.b16 %v731, %v730
  %v967 = vpack.c.b16 %v733, %v732
  %v968 = vpack.c.b16 %v735, %v734
  %v969 = vpack.c.b16 %v737, %v736
  %v970 = vpack.c.b16 %v739, %v738
  %v971 = vpack.c.b16 %v741, %v740
  %v972 = vpack.c.b16 %v743, %v742
  %v973 = vpack.c.b16 %v745, %v744
  %v974 = vpack.c.b16 %v747, %v746
  %v975 = vpack.c.b16 %v749, %v748
  %v976 = vpack.c.b16 %v751, %v750
  %v977 = vpack.c.b16 %v753, %v752
  %v978 = vpack.c.b16 %v755, %v754
  %v979 = vpack.c.b16 %v757, %v756
  %v980 = vpack.c.b16 %v759, %v758
  %v981 = vpack.c.b16 %v761, %v760
  %v982 = vpack.c.b16 %v763, %v762
  %v983 = vpack.c.b16 %v765, %v764
  %v984 = vpack.c.b16 %v767, %v766
  %v985 = vpack.c.b16 %v769, %v768
  %v986 = vpack.c.b16 %v771, %v770
  %v987 = vpack.c.b16 %v773, %v772
  %v988 = vpack.c.b16 %v775, %v774
  %v989 = vpack.c.b16 %v777, %v776
  %v990 = vpack.c.b16 %v779, %v778
  %v991 = vpack.c.b16 %v781, %v780
  %v992 = vpack.c.b16 %v783, %v782
  %v993 = vpack.c.b16 %v785, %v784
  %v994 = vpack.c.b16 %v787, %v786
  %v995 = vpack.c.b16 %v789, %v788
  %v996 = vpack.c.b16 %v791, %v790
  %v997 = vpack.c.b16 %v793, %v792
  %v998 = vpack.c.b16 %v795, %v794
  %v999 = vpack.c.b16 %v797, %v796
  %v1000 = vpack.c.b16 %v799, %v798
  %v1001 = vpack.c.b16 %v801, %v800
  %v1002 = vpack.c.b16 %v803, %v802
  %v1003 = vpack.c.b16 %v805, %v804
  %v1004 = vpack.c.b16 %v807, %v806
  %v1005 = vpack.c.b16 %v809, %v808
  %v1006 = vpack.c.b16 %v811, %v810
  %v1007 = vpack.c.b16 %v813, %v812
  %v1008 = vpack.c.b16 %v815, %v814
  %v1009 = vpack.c.b16 %v817, %v816
  %v1010 = vpack.c.b16 %v819, %v818
  %v1011 = vpack.c.b16 %v821, %v820
  %v1012 = vpack.c.b16 %v823, %v822
  %v1013 = vpack.c.b16 %v825, %v824
  %v1014 = vpack.c.b16 %v827, %v826
  %v1015 = vpack.c.b16 %v829, %v828
  %v1016 = vpack.c.b16 %v831, %v830
  %v1017 = vpack.c.b16 %v833, %v832
  %v1018 = vpack.c.b16 %v835, %v834
  %v1019 = vpack.c.b16 %v837, %v836
  %v1020 = vpack.c.b16 %v839, %v838
  %v1021 = vpack.c.b16 %v841, %v840
  %v1022 = vpack.c.b16 %v843, %v842
  %v1023 = vpack.c.b16 %v845, %v844
  %v1024 = vpack.c.b16 %v847, %v846
  %v1025 = vpack.c.b16 %v849, %v848
  %v1026 = vpack.c.b16 %v851, %v850
  %v1027 = vpack.c.b16 %v853, %v852
  %v1028 = vpack.c.b16 %v855, %v854
  %v1029 = vpack.c.b16 %v857, %v856
  %v1030 = vpack.c.b16 %v859, %v858
  %v1031 = vpack.c.b16 %v861, %v860
  %v1032 = vpack.c.b16 %v863, %v862
  %v1033 = vpack.c.b16 %v865, %v864
  %v1034 = vpack.c.b16 %v867, %v866
  %v1035 = vpack.c.b16 %v869, %v868
  %v1036 = vpack.c.b16 %v871, %v870
  %v1037 = vpack.c.b16 %v873, %v872
  %v1038 = vpack.c.b16 %v875, %v874
  %v1039 = vpack.c.b16 %v877, %v876
  %v1040 = vpack.c.b16 %v879, %v878
  %v1041 = vpack.c.b16 %v881, %v880
  %v1042 = vpack.c.b16 %v883, %v882
  %v1043 = vpack.c.b16 %v885, %v884
  %v1044 = vpack.c.b16 %v887, %v886
  %v1045 = vpack.c.b16 %v889, %v888
  %v1046 = vpack.c.b16 %v891, %v890
  %v1047 = vpack.c.b16 %v893, %v892
  %v1048 = vpack.c.b16 %v895, %v894
  %v1049 = vpack.c.b16 %v897, %v896
  %v1050 = vpack.c.b16 %v899, %v898
  %v1051 = vpack.c.b16 %v901, %v900
  %v1052 = vpack.c.b16 %v903, %v902
  %v1053 = vpack.c.b16 %v905, %v904
  %v1054 = vpack.c.b16 %v907, %v906
  %v1055 = vpack.c.b16 %v909, %v908
  %v1056 = vpack.c.b16 %v911, %v910
  %v1057 = vpack.c.b16 %v913, %v912
  %v1058 = vpack.c.b16 %v915, %v914
  %v1059 = vpack.c.b16 %v917, %v916
  %v1060 = vpack.c.b16 %v919, %v918
  %v1061 = vpack.c.b16 %v921, %v920
  %v1062 = vpack.c.b16 %v923, %v922
  %v1063 = vpack.c.b16 %v925, %v924
  %v1064 = vpack.c.b16 %v927, %v926
  %v1065 = vpack.c.b16 %v929, %v928
  %v1066 = vpack.c.b16 %v931, %v930
  %v1067 = vpack.c.b16 %v933, %v932
  %v1068 = vpack.c.b16 %v935, %v934
  %v1069 = vpack.c.b16 %v937, %v936
  %v1070 = vpack.c.b16 %v939, %v938
  %v1071 = vpack.c.b16 %v941, %v940
  %v1072 = vpack.c.b16 %v943, %v942
  %v1073 = vpack.c.b16 %v945, %v944
  %1202 = vmatpush.bf16.msra.mxu0 %v953
  %1203 = vmatpush.bf16.msra.mxu0 %v952
  %1204 = vmatpush.bf16.msra.mxu0 %v951
  %1205 = vmatpush.bf16.msra.mxu0 %v950
  %1206 = vmatpush.bf16.msra.mxu0 %v949
  %1207 = vmatpush.bf16.msra.mxu0 %v948
  %1208 = vmatpush.bf16.msra.mxu0 %v947
  %1209 = vmatpush.bf16.msra.mxu0 %v946
  %1210 = vmatmul.bf16.gmra.mxu0 %v370
  %v1211 = vpop.f32.mrf.mxu0
  %v1212 = vadd.f32 %v296, %v1211
  %v1213 = vpop.f32.mrf.mxu0
  %v1214 = vadd.f32 %v296, %v1213
  %1215 = vmatmul.bf16.gmra.mxu0 %v386
  %v1216 = vpop.f32.mrf.mxu0
  %v1217 = vadd.f32 %v296, %v1216
  %v1218 = vpop.f32.mrf.mxu0
  %1219 = vdwg.mxu0
  %1220 = vmatpush.bf16.msra.mxu0 %v961
  %1221 = vmatpush.bf16.msra.mxu0 %v960
  %1222 = vmatpush.bf16.msra.mxu0 %v959
  %1223 = vmatpush.bf16.msra.mxu0 %v958
  %1224 = vmatpush.bf16.msra.mxu0 %v957
  %1225 = vmatpush.bf16.msra.mxu0 %v956
  %1226 = vmatpush.bf16.msra.mxu0 %v955
  %1227 = vmatpush.bf16.msra.mxu0 %v954
  %1228 = vmatmul.bf16.gmra.mxu0 %v371
  %v1229 = vpop.f32.mrf.mxu0
  %v1230 = vadd.f32 %v1212, %v1229
  %v1231 = vpop.f32.mrf.mxu0
  %v1232 = vadd.f32 %v1214, %v1231
  %1233 = vmatmul.bf16.gmra.mxu0 %v387
  %v1234 = vpop.f32.mrf.mxu0
  %v1235 = vadd.f32 %v1217, %v1234
  %v1236 = vpop.f32.mrf.mxu0
  %1237 = vdwg.mxu0
  %1238 = vmatpush.bf16.msra.mxu0 %v969
  %1239 = vmatpush.bf16.msra.mxu0 %v968
  %1240 = vmatpush.bf16.msra.mxu0 %v967
  %1241 = vmatpush.bf16.msra.mxu0 %v966
  %1242 = vmatpush.bf16.msra.mxu0 %v965
  %1243 = vmatpush.bf16.msra.mxu0 %v964
  %1244 = vmatpush.bf16.msra.mxu0 %v963
  %1245 = vmatpush.bf16.msra.mxu0 %v962
  %1246 = vmatmul.bf16.gmra.mxu0 %v372
  %v1247 = vpop.f32.mrf.mxu0
  %v1248 = vadd.f32 %v1230, %v1247
  %v1249 = vpop.f32.mrf.mxu0
  %v1250 = vadd.f32 %v1232, %v1249
  %1251 = vmatmul.bf16.gmra.mxu0 %v388
  %v1252 = vpop.f32.mrf.mxu0
  %v1253 = vadd.f32 %v1235, %v1252
  %v1254 = vpop.f32.mrf.mxu0
  %1255 = vdwg.mxu0
  %1256 = vmatpush.bf16.msra.mxu0 %v977
  %1257 = vmatpush.bf16.msra.mxu0 %v976
  %1258 = vmatpush.bf16.msra.mxu0 %v975
  %1259 = vmatpush.bf16.msra.mxu0 %v974
  %1260 = vmatpush.bf16.msra.mxu0 %v973
  %1261 = vmatpush.bf16.msra.mxu0 %v972
  %1262 = vmatpush.bf16.msra.mxu0 %v971
  %1263 = vmatpush.bf16.msra.mxu0 %v970
  %1264 = vmatmul.bf16.gmra.mxu0 %v373
  %v1265 = vpop.f32.mrf.mxu0
  %v1266 = vadd.f32 %v1248, %v1265
  %v1267 = vpop.f32.mrf.mxu0
  %v1268 = vadd.f32 %v1250, %v1267
  %1269 = vmatmul.bf16.gmra.mxu0 %v389
  %v1270 = vpop.f32.mrf.mxu0
  %v1271 = vadd.f32 %v1253, %v1270
  %v1272 = vpop.f32.mrf.mxu0
  %1273 = vdwg.mxu0
  %1274 = vmatpush.bf16.msra.mxu0 %v985
  %1275 = vmatpush.bf16.msra.mxu0 %v984
  %1276 = vmatpush.bf16.msra.mxu0 %v983
  %1277 = vmatpush.bf16.msra.mxu0 %v982
  %1278 = vmatpush.bf16.msra.mxu0 %v981
  %1279 = vmatpush.bf16.msra.mxu0 %v980
  %1280 = vmatpush.bf16.msra.mxu0 %v979
  %1281 = vmatpush.bf16.msra.mxu0 %v978
  %1282 = vmatmul.bf16.gmra.mxu0 %v374
  %v1283 = vpop.f32.mrf.mxu0
  %v1284 = vadd.f32 %v1266, %v1283
  %v1285 = vpop.f32.mrf.mxu0
  %v1286 = vadd.f32 %v1268, %v1285
  %1287 = vmatmul.bf16.gmra.mxu0 %v390
  %v1288 = vpop.f32.mrf.mxu0
  %v1289 = vadd.f32 %v1271, %v1288
  %v1290 = vpop.f32.mrf.mxu0
  %1291 = vdwg.mxu0
  %1292 = vmatpush.bf16.msra.mxu0 %v993
  %1293 = vmatpush.bf16.msra.mxu0 %v992
  %1294 = vmatpush.bf16.msra.mxu0 %v991
  %1295 = vmatpush.bf16.msra.mxu0 %v990
  %1296 = vmatpush.bf16.msra.mxu0 %v989
  %1297 = vmatpush.bf16.msra.mxu0 %v988
  %1298 = vmatpush.bf16.msra.mxu0 %v987
  %1299 = vmatpush.bf16.msra.mxu0 %v986
  %1300 = vmatmul.bf16.gmra.mxu0 %v375
  %v1301 = vpop.f32.mrf.mxu0
  %v1302 = vadd.f32 %v1284, %v1301
  %v1303 = vpop.f32.mrf.mxu0
  %v1304 = vadd.f32 %v1286, %v1303
  %1305 = vmatmul.bf16.gmra.mxu0 %v391
  %v1306 = vpop.f32.mrf.mxu0
  %v1307 = vadd.f32 %v1289, %v1306
  %v1308 = vpop.f32.mrf.mxu0
  %1309 = vdwg.mxu0
  %1310 = vmatpush.bf16.msra.mxu0 %v1001
  %1311 = vmatpush.bf16.msra.mxu0 %v1000
  %1312 = vmatpush.bf16.msra.mxu0 %v999
  %1313 = vmatpush.bf16.msra.mxu0 %v998
  %1314 = vmatpush.bf16.msra.mxu0 %v997
  %1315 = vmatpush.bf16.msra.mxu0 %v996
  %1316 = vmatpush.bf16.msra.mxu0 %v995
  %1317 = vmatpush.bf16.msra.mxu0 %v994
  %1318 = vmatmul.bf16.gmra.mxu0 %v376
  %v1319 = vpop.f32.mrf.mxu0
  %v1320 = vadd.f32 %v1302, %v1319
  %v1321 = vpop.f32.mrf.mxu0
  %v1322 = vadd.f32 %v1304, %v1321
  %1323 = vmatmul.bf16.gmra.mxu0 %v392
  %v1324 = vpop.f32.mrf.mxu0
  %v1325 = vadd.f32 %v1307, %v1324
  %v1326 = vpop.f32.mrf.mxu0
  %1327 = vdwg.mxu0
  %1328 = vmatpush.bf16.msra.mxu0 %v1009
  %1329 = vmatpush.bf16.msra.mxu0 %v1008
  %1330 = vmatpush.bf16.msra.mxu0 %v1007
  %1331 = vmatpush.bf16.msra.mxu0 %v1006
  %1332 = vmatpush.bf16.msra.mxu0 %v1005
  %1333 = vmatpush.bf16.msra.mxu0 %v1004
  %1334 = vmatpush.bf16.msra.mxu0 %v1003
  %1335 = vmatpush.bf16.msra.mxu0 %v1002
  %1336 = vmatmul.bf16.gmra.mxu0 %v377
  %v1337 = vpop.f32.mrf.mxu0
  %v1338 = vadd.f32 %v1320, %v1337
  %v1339 = vpop.f32.mrf.mxu0
  %v1340 = vadd.f32 %v1322, %v1339
  %1341 = vmatmul.bf16.gmra.mxu0 %v393
  %v1342 = vpop.f32.mrf.mxu0
  %v1343 = vadd.f32 %v1325, %v1342
  %v1344 = vpop.f32.mrf.mxu0
  %1345 = vdwg.mxu0
  %1346 = vmatpush.bf16.msra.mxu0 %v1017
  %1347 = vmatpush.bf16.msra.mxu0 %v1016
  %1348 = vmatpush.bf16.msra.mxu0 %v1015
  %1349 = vmatpush.bf16.msra.mxu0 %v1014
  %1350 = vmatpush.bf16.msra.mxu0 %v1013
  %1351 = vmatpush.bf16.msra.mxu0 %v1012
  %1352 = vmatpush.bf16.msra.mxu0 %v1011
  %1353 = vmatpush.bf16.msra.mxu0 %v1010
  %1354 = vmatmul.bf16.gmra.mxu0 %v378
  %v1355 = vpop.f32.mrf.mxu0
  %v1356 = vadd.f32 %v1338, %v1355
  %v1357 = vpop.f32.mrf.mxu0
  %v1358 = vadd.f32 %v1340, %v1357
  %1359 = vmatmul.bf16.gmra.mxu0 %v394
  %v1360 = vpop.f32.mrf.mxu0
  %v1361 = vadd.f32 %v1343, %v1360
  %v1362 = vpop.f32.mrf.mxu0
  %1363 = vdwg.mxu0
  %1364 = vmatpush.bf16.msra.mxu0 %v1025
  %1365 = vmatpush.bf16.msra.mxu0 %v1024
  %1366 = vmatpush.bf16.msra.mxu0 %v1023
  %1367 = vmatpush.bf16.msra.mxu0 %v1022
  %1368 = vmatpush.bf16.msra.mxu0 %v1021
  %1369 = vmatpush.bf16.msra.mxu0 %v1020
  %1370 = vmatpush.bf16.msra.mxu0 %v1019
  %1371 = vmatpush.bf16.msra.mxu0 %v1018
  %1372 = vmatmul.bf16.gmra.mxu0 %v379
  %v1373 = vpop.f32.mrf.mxu0
  %v1374 = vadd.f32 %v1356, %v1373
  %v1375 = vpop.f32.mrf.mxu0
  %v1376 = vadd.f32 %v1358, %v1375
  %1377 = vmatmul.bf16.gmra.mxu0 %v395
  %v1378 = vpop.f32.mrf.mxu0
  %v1379 = vadd.f32 %v1361, %v1378
  %v1380 = vpop.f32.mrf.mxu0
  %1381 = vdwg.mxu0
  %1382 = vmatpush.bf16.msra.mxu0 %v1033
  %1383 = vmatpush.bf16.msra.mxu0 %v1032
  %1384 = vmatpush.bf16.msra.mxu0 %v1031
  %1385 = vmatpush.bf16.msra.mxu0 %v1030
  %1386 = vmatpush.bf16.msra.mxu0 %v1029
  %1387 = vmatpush.bf16.msra.mxu0 %v1028
  %1388 = vmatpush.bf16.msra.mxu0 %v1027
  %1389 = vmatpush.bf16.msra.mxu0 %v1026
  %1390 = vmatmul.bf16.gmra.mxu0 %v380
  %v1391 = vpop.f32.mrf.mxu0
  %v1392 = vadd.f32 %v1374, %v1391
  %v1393 = vpop.f32.mrf.mxu0
  %v1394 = vadd.f32 %v1376, %v1393
  %1395 = vmatmul.bf16.gmra.mxu0 %v396
  %v1396 = vpop.f32.mrf.mxu0
  %v1397 = vadd.f32 %v1379, %v1396
  %v1398 = vpop.f32.mrf.mxu0
  %1399 = vdwg.mxu0
  %1400 = vmatpush.bf16.msra.mxu0 %v1041
  %1401 = vmatpush.bf16.msra.mxu0 %v1040
  %1402 = vmatpush.bf16.msra.mxu0 %v1039
  %1403 = vmatpush.bf16.msra.mxu0 %v1038
  %1404 = vmatpush.bf16.msra.mxu0 %v1037
  %1405 = vmatpush.bf16.msra.mxu0 %v1036
  %1406 = vmatpush.bf16.msra.mxu0 %v1035
  %1407 = vmatpush.bf16.msra.mxu0 %v1034
  %1408 = vmatmul.bf16.gmra.mxu0 %v381
  %v1409 = vpop.f32.mrf.mxu0
  %v1410 = vadd.f32 %v1392, %v1409
  %v1411 = vpop.f32.mrf.mxu0
  %v1412 = vadd.f32 %v1394, %v1411
  %1413 = vmatmul.bf16.gmra.mxu0 %v397
  %v1414 = vpop.f32.mrf.mxu0
  %v1415 = vadd.f32 %v1397, %v1414
  %v1416 = vpop.f32.mrf.mxu0
  %1417 = vdwg.mxu0
  %1418 = vmatpush.bf16.msra.mxu0 %v1049
  %1419 = vmatpush.bf16.msra.mxu0 %v1048
  %1420 = vmatpush.bf16.msra.mxu0 %v1047
  %1421 = vmatpush.bf16.msra.mxu0 %v1046
  %1422 = vmatpush.bf16.msra.mxu0 %v1045
  %1423 = vmatpush.bf16.msra.mxu0 %v1044
  %1424 = vmatpush.bf16.msra.mxu0 %v1043
  %1425 = vmatpush.bf16.msra.mxu0 %v1042
  %1426 = vmatmul.bf16.gmra.mxu0 %v382
  %v1427 = vpop.f32.mrf.mxu0
  %v1428 = vadd.f32 %v1410, %v1427
  %v1429 = vpop.f32.mrf.mxu0
  %v1430 = vadd.f32 %v1412, %v1429
  %1431 = vmatmul.bf16.gmra.mxu0 %v398
  %v1432 = vpop.f32.mrf.mxu0
  %v1433 = vadd.f32 %v1415, %v1432
  %v1434 = vpop.f32.mrf.mxu0
  %1435 = vdwg.mxu0
  %1436 = vmatpush.bf16.msra.mxu0 %v1057
  %1437 = vmatpush.bf16.msra.mxu0 %v1056
  %1438 = vmatpush.bf16.msra.mxu0 %v1055
  %1439 = vmatpush.bf16.msra.mxu0 %v1054
  %1440 = vmatpush.bf16.msra.mxu0 %v1053
  %1441 = vmatpush.bf16.msra.mxu0 %v1052
  %1442 = vmatpush.bf16.msra.mxu0 %v1051
  %1443 = vmatpush.bf16.msra.mxu0 %v1050
  %1444 = vmatmul.bf16.gmra.mxu0 %v383
  %v1445 = vpop.f32.mrf.mxu0
  %v1446 = vadd.f32 %v1428, %v1445
  %v1447 = vpop.f32.mrf.mxu0
  %v1448 = vadd.f32 %v1430, %v1447
  %1449 = vmatmul.bf16.gmra.mxu0 %v399
  %v1450 = vpop.f32.mrf.mxu0
  %v1451 = vadd.f32 %v1433, %v1450
  %v1452 = vpop.f32.mrf.mxu0
  %1453 = vdwg.mxu0
  %1454 = vmatpush.bf16.msra.mxu0 %v1065
  %1455 = vmatpush.bf16.msra.mxu0 %v1064
  %1456 = vmatpush.bf16.msra.mxu0 %v1063
  %1457 = vmatpush.bf16.msra.mxu0 %v1062
  %1458 = vmatpush.bf16.msra.mxu0 %v1061
  %1459 = vmatpush.bf16.msra.mxu0 %v1060
  %1460 = vmatpush.bf16.msra.mxu0 %v1059
  %1461 = vmatpush.bf16.msra.mxu0 %v1058
  %1462 = vmatmul.bf16.gmra.mxu0 %v384
  %v1463 = vpop.f32.mrf.mxu0
  %v1464 = vadd.f32 %v1446, %v1463
  %v1465 = vpop.f32.mrf.mxu0
  %v1466 = vadd.f32 %v1448, %v1465
  %1467 = vmatmul.bf16.gmra.mxu0 %v400
  %v1468 = vpop.f32.mrf.mxu0
  %v1469 = vadd.f32 %v1451, %v1468
  %v1470 = vpop.f32.mrf.mxu0
  %1471 = vdwg.mxu0
  %1472 = vmatpush.bf16.msra.mxu0 %v1073
  %1473 = vmatpush.bf16.msra.mxu0 %v1072
  %1474 = vmatpush.bf16.msra.mxu0 %v1071
  %1475 = vmatpush.bf16.msra.mxu0 %v1070
  %1476 = vmatpush.bf16.msra.mxu0 %v1069
  %1477 = vmatpush.bf16.msra.mxu0 %v1068
  %1478 = vmatpush.bf16.msra.mxu0 %v1067
  %1479 = vmatpush.bf16.msra.mxu0 %v1066
  %1480 = vmatmul.bf16.gmra.mxu0 %v385
  %v1481 = vpop.f32.mrf.mxu0
  %v1482 = vadd.f32 %v1464, %v1481
  %v1483 = vpop.f32.mrf.mxu0
  %v1484 = vadd.f32 %v1466, %v1483
  %1485 = vmatmul.bf16.gmra.mxu0 %v401
  %v1486 = vpop.f32.mrf.mxu0
  %v1487 = vadd.f32 %v1469, %v1486
  %v1488 = vpop.f32.mrf.mxu0
  %1489 = vdwg.mxu0
  %v1490 = vmax.f32 %v1482, 0.0
  %v1491 = vmax.f32 %v1484, 0.0
  %v1492 = vmax.f32 %v1487, 0.0
  %v1493 = vpack.c.bf16 %v1490, %v1490
  %v1494 = vpack.c.bf16 %v1491, %v1491
  %v1495 = vpack.c.bf16 %v1492, %v1492
  %1496 = vst [vmem:[%s3] sm:$0xf] %v1493
  %1497 = vst [vmem:[%s3 + $0x4] sm:$0xf] %v1494
  %1498 = vst [vmem:[%s3 + $0x8] sm:$0x1] %v1495
  // Predicated region
  $region14: #{atari_forward.4} parent=0 // pred_check
    _
  $region15: #{atari_forward.4} parent=0 // pred_check_branch
    %1500 = sbr.rel (0) target = $region17
  $region16: #{atari_forward.4} parent=0 // pred_region
    _
  $region17: #{atari_forward.4} parent=0 // pred_fallthru
    _
  // Predicated region
  $region18: #{atari_forward.4} parent=0 // pred_check
    _
  $region19: #{atari_forward.4} parent=0 // pred_check_branch
    %1502 = sbr.rel (0) target = $region21
  $region20: #{atari_forward.4} parent=0 // pred_region
    _
  $region21: #{atari_forward.4} parent=0 // pred_fallthru
    _

// kernel: atari_forward.5
$region0: #{atari_forward.5}
  #allocation0 [shape = 'u32[]', space=smem, size = 0x4, offset = 0x4, fixed_abs, tag = 'smem constant byte address 0x4 - core index']
  #allocation1 [shape = 'u32[72,128]{1,0:T(1,128)}', space=vmem, size = 0x9000, scoped, tag = 'internal scratch']
  %s0 = inlined_call_operand.vmem [shape: bf16[2,1152], index: 0, kind: input, shape index: {}]
  %s1 = inlined_call_operand.vmem [shape: bf16[1152,256], index: 1, kind: input, shape index: {}]
  %s2 = inlined_call_operand.vmem [shape: f32[1,256], index: 2, kind: input, shape index: {}]
  %s3 = inlined_call_operand.vmem [shape: bf16[256,128], index: 3, kind: input, shape index: {}]
  %s4 = inlined_call_operand.vmem [shape: f32[1,128], index: 4, kind: input, shape index: {}]
  %s5 = inlined_call_operand.vmem [shape: f32[2,128], index: 5, kind: output, shape index: {}]
  %s6 = sld [smem:[#allocation0]]
  $region30: #{atari_forward.5} parent=0
    _
  %s8 = ssub.s32 1, %s6
  %s9 = scalar_select 0, %s8, %s6
  // Predicated region
  $region2: #{atari_forward.5} parent=0 // pred_check
    _
  $region3: #{atari_forward.5} parent=0 // pred_check_branch
    %11 = sbr.rel (0) target = $region5
  $region4: #{atari_forward.5} parent=0 // pred_region
    _
  $region5: #{atari_forward.5} parent=0 // pred_fallthru
    _
  // Predicated region
  $region6: #{atari_forward.5} parent=0 // pred_check
    _
  $region7: #{atari_forward.5} parent=0 // pred_check_branch
    %13 = sbr.rel (0) target = $region9
  $region8: #{atari_forward.5} parent=0 // pred_region
    _
  $region9: #{atari_forward.5} parent=0 // pred_fallthru
    _
  // Predicated region
  $region10: #{atari_forward.5} parent=0 // pred_check
    _
  $region11: #{atari_forward.5} parent=0 // pred_check_branch
    %15 = sbr.rel (0) target = $region13
  $region12: #{atari_forward.5} parent=0 // pred_region
    _
  $region13: #{atari_forward.5} parent=0 // pred_fallthru
    _
  // Predicated region
  $region14: #{atari_forward.5} parent=0 // pred_check
    _
  $region15: #{atari_forward.5} parent=0 // pred_check_branch
    %17 = sbr.rel (0) target = $region17
  $region16: #{atari_forward.5} parent=0 // pred_region
    _
  $region17: #{atari_forward.5} parent=0 // pred_fallthru
    _
  // Predicated region
  $region18: #{atari_forward.5} parent=0 // pred_check
    _
  $region19: #{atari_forward.5} parent=0 // pred_check_branch
    %19 = sbr.rel (0) target = $region21
  $region20: #{atari_forward.5} parent=0 // pred_region
    _
  $region21: #{atari_forward.5} parent=0 // pred_fallthru
    _
  %v20 = vld [vmem:[%s0] sm:$0xff]
  %v21 = vld [vmem:[%s0 + $0x8] sm:$0x1]
  %v22 = vld [vmem:[%s1] sm:$0xff]
  %v23 = vld [vmem:[%s1 + $0x8] sm:$0xff]
  %v24 = vld [vmem:[%s1 + $0x10] sm:$0xff]
  %v25 = vld [vmem:[%s1 + $0x18] sm:$0xff]
  %v26 = vld [vmem:[%s1 + $0x20] sm:$0xff]
  %v27 = vld [vmem:[%s1 + $0x28] sm:$0xff]
  %v28 = vld [vmem:[%s1 + $0x30] sm:$0xff]
  %v29 = vld [vmem:[%s1 + $0x38] sm:$0xff]
  %v30 = vld [vmem:[%s1 + $0x40] sm:$0xff]
  %v31 = vld [vmem:[%s1 + $0x48] sm:$0xff]
  %v32 = vld [vmem:[%s1 + $0x50] sm:$0xff]
  %v33 = vld [vmem:[%s1 + $0x58] sm:$0xff]
  %v34 = vld [vmem:[%s1 + $0x60] sm:$0xff]
  %v35 = vld [vmem:[%s1 + $0x68] sm:$0xff]
  %v36 = vld [vmem:[%s1 + $0x70] sm:$0xff]
  %v37 = vld [vmem:[%s1 + $0x78] sm:$0xff]
  %v38 = vld [vmem:[%s1 + $0x80] sm:$0xff]
  %v39 = vld [vmem:[%s1 + $0x88] sm:$0xff]
  %v40 = vld [vmem:[%s1 + $0x90] sm:$0xff]
  %v41 = vld [vmem:[%s1 + $0x98] sm:$0xff]
  %v42 = vld [vmem:[%s1 + $0xa0] sm:$0xff]
  %v43 = vld [vmem:[%s1 + $0xa8] sm:$0xff]
  %v44 = vld [vmem:[%s1 + $0xb0] sm:$0xff]
  %v45 = vld [vmem:[%s1 + $0xb8] sm:$0xff]
  %v46 = vld [vmem:[%s1 + $0xc0] sm:$0xff]
  %v47 = vld [vmem:[%s1 + $0xc8] sm:$0xff]
  %v48 = vld [vmem:[%s1 + $0xd0] sm:$0xff]
  %v49 = vld [vmem:[%s1 + $0xd8] sm:$0xff]
  %v50 = vld [vmem:[%s1 + $0xe0] sm:$0xff]
  %v51 = vld [vmem:[%s1 + $0xe8] sm:$0xff]
  %v52 = vld [vmem:[%s1 + $0xf0] sm:$0xff]
  %v53 = vld [vmem:[%s1 + $0xf8] sm:$0xff]
  %v54 = vld [vmem:[%s1 + $0x100] sm:$0xff]
  %v55 = vld [vmem:[%s1 + $0x108] sm:$0xff]
  %v56 = vld [vmem:[%s1 + $0x110] sm:$0xff]
  %v57 = vld [vmem:[%s1 + $0x118] sm:$0xff]
  %v58 = vld [vmem:[%s1 + $0x120] sm:$0xff]
  %v59 = vld [vmem:[%s1 + $0x128] sm:$0xff]
  %v60 = vld [vmem:[%s1 + $0x130] sm:$0xff]
  %v61 = vld [vmem:[%s1 + $0x138] sm:$0xff]
  %v62 = vld [vmem:[%s1 + $0x140] sm:$0xff]
  %v63 = vld [vmem:[%s1 + $0x148] sm:$0xff]
  %v64 = vld [vmem:[%s1 + $0x150] sm:$0xff]
  %v65 = vld [vmem:[%s1 + $0x158] sm:$0xff]
  %v66 = vld [vmem:[%s1 + $0x160] sm:$0xff]
  %v67 = vld [vmem:[%s1 + $0x168] sm:$0xff]
  %v68 = vld [vmem:[%s1 + $0x170] sm:$0xff]
  %v69 = vld [vmem:[%s1 + $0x178] sm:$0xff]
  %v70 = vld [vmem:[%s1 + $0x180] sm:$0xff]
  %v71 = vld [vmem:[%s1 + $0x188] sm:$0xff]
  %v72 = vld [vmem:[%s1 + $0x190] sm:$0xff]
  %v73 = vld [vmem:[%s1 + $0x198] sm:$0xff]
  %v74 = vld [vmem:[%s1 + $0x1a0] sm:$0xff]
  %v75 = vld [vmem:[%s1 + $0x1a8] sm:$0xff]
  %v76 = vld [vmem:[%s1 + $0x1b0] sm:$0xff]
  %v77 = vld [vmem:[%s1 + $0x1b8] sm:$0xff]
  %v78 = vld [vmem:[%s1 + $0x1c0] sm:$0xff]
  %v79 = vld [vmem:[%s1 + $0x1c8] sm:$0xff]
  %v80 = vld [vmem:[%s1 + $0x1d0] sm:$0xff]
  %v81 = vld [vmem:[%s1 + $0x1d8] sm:$0xff]
  %v82 = vld [vmem:[%s1 + $0x1e0] sm:$0xff]
  %v83 = vld [vmem:[%s1 + $0x1e8] sm:$0xff]
  %v84 = vld [vmem:[%s1 + $0x1f0] sm:$0xff]
  %v85 = vld [vmem:[%s1 + $0x1f8] sm:$0xff]
  %v86 = vld [vmem:[%s1 + $0x200] sm:$0xff]
  %v87 = vld [vmem:[%s1 + $0x208] sm:$0xff]
  %v88 = vld [vmem:[%s1 + $0x210] sm:$0xff]
  %v89 = vld [vmem:[%s1 + $0x218] sm:$0xff]
  %v90 = vld [vmem:[%s1 + $0x220] sm:$0xff]
  %v91 = vld [vmem:[%s1 + $0x228] sm:$0xff]
  %v92 = vld [vmem:[%s1 + $0x230] sm:$0xff]
  %v93 = vld [vmem:[%s1 + $0x238] sm:$0xff]
  %v94 = vld [vmem:[%s1 + $0x240] sm:$0xff]
  %v95 = vld [vmem:[%s1 + $0x248] sm:$0xff]
  %v96 = vld [vmem:[%s1 + $0x250] sm:$0xff]
  %v97 = vld [vmem:[%s1 + $0x258] sm:$0xff]
  %v98 = vld [vmem:[%s1 + $0x260] sm:$0xff]
  %v99 = vld [vmem:[%s1 + $0x268] sm:$0xff]
  %v100 = vld [vmem:[%s1 + $0x270] sm:$0xff]
  %v101 = vld [vmem:[%s1 + $0x278] sm:$0xff]
  %v102 = vld [vmem:[%s1 + $0x280] sm:$0xff]
  %v103 = vld [vmem:[%s1 + $0x288] sm:$0xff]
  %v104 = vld [vmem:[%s1 + $0x290] sm:$0xff]
  %v105 = vld [vmem:[%s1 + $0x298] sm:$0xff]
  %v106 = vld [vmem:[%s1 + $0x2a0] sm:$0xff]
  %v107 = vld [vmem:[%s1 + $0x2a8] sm:$0xff]
  %v108 = vld [vmem:[%s1 + $0x2b0] sm:$0xff]
  %v109 = vld [vmem:[%s1 + $0x2b8] sm:$0xff]
  %v110 = vld [vmem:[%s1 + $0x2c0] sm:$0xff]
  %v111 = vld [vmem:[%s1 + $0x2c8] sm:$0xff]
  %v112 = vld [vmem:[%s1 + $0x2d0] sm:$0xff]
  %v113 = vld [vmem:[%s1 + $0x2d8] sm:$0xff]
  %v114 = vld [vmem:[%s1 + $0x2e0] sm:$0xff]
  %v115 = vld [vmem:[%s1 + $0x2e8] sm:$0xff]
  %v116 = vld [vmem:[%s1 + $0x2f0] sm:$0xff]
  %v117 = vld [vmem:[%s1 + $0x2f8] sm:$0xff]
  %v118 = vld [vmem:[%s1 + $0x300] sm:$0xff]
  %v119 = vld [vmem:[%s1 + $0x308] sm:$0xff]
  %v120 = vld [vmem:[%s1 + $0x310] sm:$0xff]
  %v121 = vld [vmem:[%s1 + $0x318] sm:$0xff]
  %v122 = vld [vmem:[%s1 + $0x320] sm:$0xff]
  %v123 = vld [vmem:[%s1 + $0x328] sm:$0xff]
  %v124 = vld [vmem:[%s1 + $0x330] sm:$0xff]
  %v125 = vld [vmem:[%s1 + $0x338] sm:$0xff]
  %v126 = vld [vmem:[%s1 + $0x340] sm:$0xff]
  %v127 = vld [vmem:[%s1 + $0x348] sm:$0xff]
  %v128 = vld [vmem:[%s1 + $0x350] sm:$0xff]
  %v129 = vld [vmem:[%s1 + $0x358] sm:$0xff]
  %v130 = vld [vmem:[%s1 + $0x360] sm:$0xff]
  %v131 = vld [vmem:[%s1 + $0x368] sm:$0xff]
  %v132 = vld [vmem:[%s1 + $0x370] sm:$0xff]
  %v133 = vld [vmem:[%s1 + $0x378] sm:$0xff]
  %v134 = vld [vmem:[%s1 + $0x380] sm:$0xff]
  %v135 = vld [vmem:[%s1 + $0x388] sm:$0xff]
  %v136 = vld [vmem:[%s1 + $0x390] sm:$0xff]
  %v137 = vld [vmem:[%s1 + $0x398] sm:$0xff]
  %v138 = vld [vmem:[%s1 + $0x3a0] sm:$0xff]
  %v139 = vld [vmem:[%s1 + $0x3a8] sm:$0xff]
  %v140 = vld [vmem:[%s1 + $0x3b0] sm:$0xff]
  %v141 = vld [vmem:[%s1 + $0x3b8] sm:$0xff]
  %v142 = vld [vmem:[%s1 + $0x3c0] sm:$0xff]
  %v143 = vld [vmem:[%s1 + $0x3c8] sm:$0xff]
  %v144 = vld [vmem:[%s1 + $0x3d0] sm:$0xff]
  %v145 = vld [vmem:[%s1 + $0x3d8] sm:$0xff]
  %v146 = vld [vmem:[%s1 + $0x3e0] sm:$0xff]
  %v147 = vld [vmem:[%s1 + $0x3e8] sm:$0xff]
  %v148 = vld [vmem:[%s1 + $0x3f0] sm:$0xff]
  %v149 = vld [vmem:[%s1 + $0x3f8] sm:$0xff]
  %v150 = vld [vmem:[%s1 + $0x400] sm:$0xff]
  %v151 = vld [vmem:[%s1 + $0x408] sm:$0xff]
  %v152 = vld [vmem:[%s1 + $0x410] sm:$0xff]
  %v153 = vld [vmem:[%s1 + $0x418] sm:$0xff]
  %v154 = vld [vmem:[%s1 + $0x420] sm:$0xff]
  %v155 = vld [vmem:[%s1 + $0x428] sm:$0xff]
  %v156 = vld [vmem:[%s1 + $0x430] sm:$0xff]
  %v157 = vld [vmem:[%s1 + $0x438] sm:$0xff]
  %v158 = vld [vmem:[%s1 + $0x440] sm:$0xff]
  %v159 = vld [vmem:[%s1 + $0x448] sm:$0xff]
  %v160 = vld [vmem:[%s1 + $0x450] sm:$0xff]
  %v161 = vld [vmem:[%s1 + $0x458] sm:$0xff]
  %v162 = vld [vmem:[%s1 + $0x460] sm:$0xff]
  %v163 = vld [vmem:[%s1 + $0x468] sm:$0xff]
  %v164 = vld [vmem:[%s1 + $0x470] sm:$0xff]
  %v165 = vld [vmem:[%s1 + $0x478] sm:$0xff]
  %v166 = vld [vmem:[%s2] sm:$0x3]
  %v168 = vperm.slane %v166, 0
  %v169 = vperm.slane %v166, 1
  %173 = vst [vmem:[#allocation1] ss:$9 sm:$0xff] %v20
  %v174 = vld [vmem:[#allocation1] sm:$0xff]
  %v175 = vld [vmem:[#allocation1 + $0x9] sm:$0xff]
  %v176 = vld [vmem:[#allocation1 + $0x12] sm:$0xff]
  %v177 = vld [vmem:[#allocation1 + $0x1b] sm:$0xff]
  %v178 = vld [vmem:[#allocation1 + $0x24] sm:$0xff]
  %v179 = vld [vmem:[#allocation1 + $0x2d] sm:$0xff]
  %v180 = vld [vmem:[#allocation1 + $0x36] sm:$0xff]
  %v181 = vld [vmem:[#allocation1 + $0x3f] sm:$0xff]
  %183 = vst [vmem:[#allocation1] ss:$9 sm:$0xff] %v21
  %v184 = vld [vmem:[#allocation1] sm:$0xff]
  %v338 = vunpack.c.l.b16 %v22
  %v339 = vunpack.c.h.b16 %v22
  %v340 = vunpack.c.l.b16 %v23
  %v341 = vunpack.c.h.b16 %v23
  %v342 = vunpack.c.l.b16 %v24
  %v343 = vunpack.c.h.b16 %v24
  %v344 = vunpack.c.l.b16 %v25
  %v345 = vunpack.c.h.b16 %v25
  %v346 = vunpack.c.l.b16 %v26
  %v347 = vunpack.c.h.b16 %v26
  %v348 = vunpack.c.l.b16 %v27
  %v349 = vunpack.c.h.b16 %v27
  %v350 = vunpack.c.l.b16 %v28
  %v351 = vunpack.c.h.b16 %v28
  %v352 = vunpack.c.l.b16 %v29
  %v353 = vunpack.c.h.b16 %v29
  %v354 = vunpack.c.l.b16 %v30
  %v355 = vunpack.c.h.b16 %v30
  %v356 = vunpack.c.l.b16 %v31
  %v357 = vunpack.c.h.b16 %v31
  %v358 = vunpack.c.l.b16 %v32
  %v359 = vunpack.c.h.b16 %v32
  %v360 = vunpack.c.l.b16 %v33
  %v361 = vunpack.c.h.b16 %v33
  %v362 = vunpack.c.l.b16 %v34
  %v363 = vunpack.c.h.b16 %v34
  %v364 = vunpack.c.l.b16 %v35
  %v365 = vunpack.c.h.b16 %v35
  %v366 = vunpack.c.l.b16 %v36
  %v367 = vunpack.c.h.b16 %v36
  %v368 = vunpack.c.l.b16 %v37
  %v369 = vunpack.c.h.b16 %v37
  %v370 = vunpack.c.l.b16 %v38
  %v371 = vunpack.c.h.b16 %v38
  %v372 = vunpack.c.l.b16 %v39
  %v373 = vunpack.c.h.b16 %v39
  %v374 = vunpack.c.l.b16 %v40
  %v375 = vunpack.c.h.b16 %v40
  %v376 = vunpack.c.l.b16 %v41
  %v377 = vunpack.c.h.b16 %v41
  %v378 = vunpack.c.l.b16 %v42
  %v379 = vunpack.c.h.b16 %v42
  %v380 = vunpack.c.l.b16 %v43
  %v381 = vunpack.c.h.b16 %v43
  %v382 = vunpack.c.l.b16 %v44
  %v383 = vunpack.c.h.b16 %v44
  %v384 = vunpack.c.l.b16 %v45
  %v385 = vunpack.c.h.b16 %v45
  %v386 = vunpack.c.l.b16 %v46
  %v387 = vunpack.c.h.b16 %v46
  %v388 = vunpack.c.l.b16 %v47
  %v389 = vunpack.c.h.b16 %v47
  %v390 = vunpack.c.l.b16 %v48
  %v391 = vunpack.c.h.b16 %v48
  %v392 = vunpack.c.l.b16 %v49
  %v393 = vunpack.c.h.b16 %v49
  %v394 = vunpack.c.l.b16 %v50
  %v395 = vunpack.c.h.b16 %v50
  %v396 = vunpack.c.l.b16 %v51
  %v397 = vunpack.c.h.b16 %v51
  %v398 = vunpack.c.l.b16 %v52
  %v399 = vunpack.c.h.b16 %v52
  %v400 = vunpack.c.l.b16 %v53
  %v401 = vunpack.c.h.b16 %v53
  %v402 = vunpack.c.l.b16 %v54
  %v403 = vunpack.c.h.b16 %v54
  %v404 = vunpack.c.l.b16 %v55
  %v405 = vunpack.c.h.b16 %v55
  %v406 = vunpack.c.l.b16 %v56
  %v407 = vunpack.c.h.b16 %v56
  %v408 = vunpack.c.l.b16 %v57
  %v409 = vunpack.c.h.b16 %v57
  %v410 = vunpack.c.l.b16 %v58
  %v411 = vunpack.c.h.b16 %v58
  %v412 = vunpack.c.l.b16 %v59
  %v413 = vunpack.c.h.b16 %v59
  %v414 = vunpack.c.l.b16 %v60
  %v415 = vunpack.c.h.b16 %v60
  %v416 = vunpack.c.l.b16 %v61
  %v417 = vunpack.c.h.b16 %v61
  %v418 = vunpack.c.l.b16 %v62
  %v419 = vunpack.c.h.b16 %v62
  %v420 = vunpack.c.l.b16 %v63
  %v421 = vunpack.c.h.b16 %v63
  %v422 = vunpack.c.l.b16 %v64
  %v423 = vunpack.c.h.b16 %v64
  %v424 = vunpack.c.l.b16 %v65
  %v425 = vunpack.c.h.b16 %v65
  %v426 = vunpack.c.l.b16 %v66
  %v427 = vunpack.c.h.b16 %v66
  %v428 = vunpack.c.l.b16 %v67
  %v429 = vunpack.c.h.b16 %v67
  %v430 = vunpack.c.l.b16 %v68
  %v431 = vunpack.c.h.b16 %v68
  %v432 = vunpack.c.l.b16 %v69
  %v433 = vunpack.c.h.b16 %v69
  %v434 = vunpack.c.l.b16 %v70
  %v435 = vunpack.c.h.b16 %v70
  %v436 = vunpack.c.l.b16 %v71
  %v437 = vunpack.c.h.b16 %v71
  %v438 = vunpack.c.l.b16 %v72
  %v439 = vunpack.c.h.b16 %v72
  %v440 = vunpack.c.l.b16 %v73
  %v441 = vunpack.c.h.b16 %v73
  %v442 = vunpack.c.l.b16 %v74
  %v443 = vunpack.c.h.b16 %v74
  %v444 = vunpack.c.l.b16 %v75
  %v445 = vunpack.c.h.b16 %v75
  %v446 = vunpack.c.l.b16 %v76
  %v447 = vunpack.c.h.b16 %v76
  %v448 = vunpack.c.l.b16 %v77
  %v449 = vunpack.c.h.b16 %v77
  %v450 = vunpack.c.l.b16 %v78
  %v451 = vunpack.c.h.b16 %v78
  %v452 = vunpack.c.l.b16 %v79
  %v453 = vunpack.c.h.b16 %v79
  %v454 = vunpack.c.l.b16 %v80
  %v455 = vunpack.c.h.b16 %v80
  %v456 = vunpack.c.l.b16 %v81
  %v457 = vunpack.c.h.b16 %v81
  %v458 = vunpack.c.l.b16 %v82
  %v459 = vunpack.c.h.b16 %v82
  %v460 = vunpack.c.l.b16 %v83
  %v461 = vunpack.c.h.b16 %v83
  %v462 = vunpack.c.l.b16 %v84
  %v463 = vunpack.c.h.b16 %v84
  %v464 = vunpack.c.l.b16 %v85
  %v465 = vunpack.c.h.b16 %v85
  %v466 = vunpack.c.l.b16 %v86
  %v467 = vunpack.c.h.b16 %v86
  %v468 = vunpack.c.l.b16 %v87
  %v469 = vunpack.c.h.b16 %v87
  %v470 = vunpack.c.l.b16 %v88
  %v471 = vunpack.c.h.b16 %v88
  %v472 = vunpack.c.l.b16 %v89
  %v473 = vunpack.c.h.b16 %v89
  %v474 = vunpack.c.l.b16 %v90
  %v475 = vunpack.c.h.b16 %v90
  %v476 = vunpack.c.l.b16 %v91
  %v477 = vunpack.c.h.b16 %v91
  %v478 = vunpack.c.l.b16 %v92
  %v479 = vunpack.c.h.b16 %v92
  %v480 = vunpack.c.l.b16 %v93
  %v481 = vunpack.c.h.b16 %v93
  %v482 = vunpack.c.l.b16 %v94
  %v483 = vunpack.c.h.b16 %v94
  %v484 = vunpack.c.l.b16 %v95
  %v485 = vunpack.c.h.b16 %v95
  %v486 = vunpack.c.l.b16 %v96
  %v487 = vunpack.c.h.b16 %v96
  %v488 = vunpack.c.l.b16 %v97
  %v489 = vunpack.c.h.b16 %v97
  %v490 = vunpack.c.l.b16 %v98
  %v491 = vunpack.c.h.b16 %v98
  %v492 = vunpack.c.l.b16 %v99
  %v493 = vunpack.c.h.b16 %v99
  %v494 = vunpack.c.l.b16 %v100
  %v495 = vunpack.c.h.b16 %v100
  %v496 = vunpack.c.l.b16 %v101
  %v497 = vunpack.c.h.b16 %v101
  %v498 = vunpack.c.l.b16 %v102
  %v499 = vunpack.c.h.b16 %v102
  %v500 = vunpack.c.l.b16 %v103
  %v501 = vunpack.c.h.b16 %v103
  %v502 = vunpack.c.l.b16 %v104
  %v503 = vunpack.c.h.b16 %v104
  %v504 = vunpack.c.l.b16 %v105
  %v505 = vunpack.c.h.b16 %v105
  %v506 = vunpack.c.l.b16 %v106
  %v507 = vunpack.c.h.b16 %v106
  %v508 = vunpack.c.l.b16 %v107
  %v509 = vunpack.c.h.b16 %v107
  %v510 = vunpack.c.l.b16 %v108
  %v511 = vunpack.c.h.b16 %v108
  %v512 = vunpack.c.l.b16 %v109
  %v513 = vunpack.c.h.b16 %v109
  %v514 = vunpack.c.l.b16 %v110
  %v515 = vunpack.c.h.b16 %v110
  %v516 = vunpack.c.l.b16 %v111
  %v517 = vunpack.c.h.b16 %v111
  %v518 = vunpack.c.l.b16 %v112
  %v519 = vunpack.c.h.b16 %v112
  %v520 = vunpack.c.l.b16 %v113
  %v521 = vunpack.c.h.b16 %v113
  %v522 = vunpack.c.l.b16 %v114
  %v523 = vunpack.c.h.b16 %v114
  %v524 = vunpack.c.l.b16 %v115
  %v525 = vunpack.c.h.b16 %v115
  %v526 = vunpack.c.l.b16 %v116
  %v527 = vunpack.c.h.b16 %v116
  %v528 = vunpack.c.l.b16 %v117
  %v529 = vunpack.c.h.b16 %v117
  %v530 = vunpack.c.l.b16 %v118
  %v531 = vunpack.c.h.b16 %v118
  %v532 = vunpack.c.l.b16 %v119
  %v533 = vunpack.c.h.b16 %v119
  %v534 = vunpack.c.l.b16 %v120
  %v535 = vunpack.c.h.b16 %v120
  %v536 = vunpack.c.l.b16 %v121
  %v537 = vunpack.c.h.b16 %v121
  %v538 = vunpack.c.l.b16 %v122
  %v539 = vunpack.c.h.b16 %v122
  %v540 = vunpack.c.l.b16 %v123
  %v541 = vunpack.c.h.b16 %v123
  %v542 = vunpack.c.l.b16 %v124
  %v543 = vunpack.c.h.b16 %v124
  %v544 = vunpack.c.l.b16 %v125
  %v545 = vunpack.c.h.b16 %v125
  %v546 = vunpack.c.l.b16 %v126
  %v547 = vunpack.c.h.b16 %v126
  %v548 = vunpack.c.l.b16 %v127
  %v549 = vunpack.c.h.b16 %v127
  %v550 = vunpack.c.l.b16 %v128
  %v551 = vunpack.c.h.b16 %v128
  %v552 = vunpack.c.l.b16 %v129
  %v553 = vunpack.c.h.b16 %v129
  %v554 = vunpack.c.l.b16 %v130
  %v555 = vunpack.c.h.b16 %v130
  %v556 = vunpack.c.l.b16 %v131
  %v557 = vunpack.c.h.b16 %v131
  %v558 = vunpack.c.l.b16 %v132
  %v559 = vunpack.c.h.b16 %v132
  %v560 = vunpack.c.l.b16 %v133
  %v561 = vunpack.c.h.b16 %v133
  %v562 = vunpack.c.l.b16 %v134
  %v563 = vunpack.c.h.b16 %v134
  %v564 = vunpack.c.l.b16 %v135
  %v565 = vunpack.c.h.b16 %v135
  %v566 = vunpack.c.l.b16 %v136
  %v567 = vunpack.c.h.b16 %v136
  %v568 = vunpack.c.l.b16 %v137
  %v569 = vunpack.c.h.b16 %v137
  %v570 = vunpack.c.l.b16 %v138
  %v571 = vunpack.c.h.b16 %v138
  %v572 = vunpack.c.l.b16 %v139
  %v573 = vunpack.c.h.b16 %v139
  %v574 = vunpack.c.l.b16 %v140
  %v575 = vunpack.c.h.b16 %v140
  %v576 = vunpack.c.l.b16 %v141
  %v577 = vunpack.c.h.b16 %v141
  %v578 = vunpack.c.l.b16 %v142
  %v579 = vunpack.c.h.b16 %v142
  %v580 = vunpack.c.l.b16 %v143
  %v581 = vunpack.c.h.b16 %v143
  %v582 = vunpack.c.l.b16 %v144
  %v583 = vunpack.c.h.b16 %v144
  %v584 = vunpack.c.l.b16 %v145
  %v585 = vunpack.c.h.b16 %v145
  %v586 = vunpack.c.l.b16 %v146
  %v587 = vunpack.c.h.b16 %v146
  %v588 = vunpack.c.l.b16 %v147
  %v589 = vunpack.c.h.b16 %v147
  %v590 = vunpack.c.l.b16 %v148
  %v591 = vunpack.c.h.b16 %v148
  %v592 = vunpack.c.l.b16 %v149
  %v593 = vunpack.c.h.b16 %v149
  %v594 = vunpack.c.l.b16 %v150
  %v595 = vunpack.c.h.b16 %v150
  %v596 = vunpack.c.l.b16 %v151
  %v597 = vunpack.c.h.b16 %v151
  %v598 = vunpack.c.l.b16 %v152
  %v599 = vunpack.c.h.b16 %v152
  %v600 = vunpack.c.l.b16 %v153
  %v601 = vunpack.c.h.b16 %v153
  %v602 = vunpack.c.l.b16 %v154
  %v603 = vunpack.c.h.b16 %v154
  %v604 = vunpack.c.l.b16 %v155
  %v605 = vunpack.c.h.b16 %v155
  %v606 = vunpack.c.l.b16 %v156
  %v607 = vunpack.c.h.b16 %v156
  %v608 = vunpack.c.l.b16 %v157
  %v609 = vunpack.c.h.b16 %v157
  %v610 = vunpack.c.l.b16 %v158
  %v611 = vunpack.c.h.b16 %v158
  %v612 = vunpack.c.l.b16 %v159
  %v613 = vunpack.c.h.b16 %v159
  %v614 = vunpack.c.l.b16 %v160
  %v615 = vunpack.c.h.b16 %v160
  %v616 = vunpack.c.l.b16 %v161
  %v617 = vunpack.c.h.b16 %v161
  %v618 = vunpack.c.l.b16 %v162
  %v619 = vunpack.c.h.b16 %v162
  %v620 = vunpack.c.l.b16 %v163
  %v621 = vunpack.c.h.b16 %v163
  %v622 = vunpack.c.l.b16 %v164
  %v623 = vunpack.c.h.b16 %v164
  %v624 = vunpack.c.l.b16 %v165
  %v625 = vunpack.c.h.b16 %v165
  %v626 = vpack.c.b16 %v340, %v338
  %v627 = vpack.c.b16 %v341, %v339
  %v628 = vpack.c.b16 %v344, %v342
  %v629 = vpack.c.b16 %v345, %v343
  %v630 = vpack.c.b16 %v348, %v346
  %v631 = vpack.c.b16 %v349, %v347
  %v632 = vpack.c.b16 %v352, %v350
  %v633 = vpack.c.b16 %v353, %v351
  %v634 = vpack.c.b16 %v356, %v354
  %v635 = vpack.c.b16 %v357, %v355
  %v636 = vpack.c.b16 %v360, %v358
  %v637 = vpack.c.b16 %v361, %v359
  %v638 = vpack.c.b16 %v364, %v362
  %v639 = vpack.c.b16 %v365, %v363
  %v640 = vpack.c.b16 %v368, %v366
  %v641 = vpack.c.b16 %v369, %v367
  %v642 = vpack.c.b16 %v372, %v370
  %v643 = vpack.c.b16 %v373, %v371
  %v644 = vpack.c.b16 %v376, %v374
  %v645 = vpack.c.b16 %v377, %v375
  %v646 = vpack.c.b16 %v380, %v378
  %v647 = vpack.c.b16 %v381, %v379
  %v648 = vpack.c.b16 %v384, %v382
  %v649 = vpack.c.b16 %v385, %v383
  %v650 = vpack.c.b16 %v388, %v386
  %v651 = vpack.c.b16 %v389, %v387
  %v652 = vpack.c.b16 %v392, %v390
  %v653 = vpack.c.b16 %v393, %v391
  %v654 = vpack.c.b16 %v396, %v394
  %v655 = vpack.c.b16 %v397, %v395
  %v656 = vpack.c.b16 %v400, %v398
  %v657 = vpack.c.b16 %v401, %v399
  %v658 = vpack.c.b16 %v404, %v402
  %v659 = vpack.c.b16 %v405, %v403
  %v660 = vpack.c.b16 %v408, %v406
  %v661 = vpack.c.b16 %v409, %v407
  %v662 = vpack.c.b16 %v412, %v410
  %v663 = vpack.c.b16 %v413, %v411
  %v664 = vpack.c.b16 %v416, %v414
  %v665 = vpack.c.b16 %v417, %v415
  %v666 = vpack.c.b16 %v420, %v418
  %v667 = vpack.c.b16 %v421, %v419
  %v668 = vpack.c.b16 %v424, %v422
  %v669 = vpack.c.b16 %v425, %v423
  %v670 = vpack.c.b16 %v428, %v426
  %v671 = vpack.c.b16 %v429, %v427
  %v672 = vpack.c.b16 %v432, %v430
  %v673 = vpack.c.b16 %v433, %v431
  %v674 = vpack.c.b16 %v436, %v434
  %v675 = vpack.c.b16 %v437, %v435
  %v676 = vpack.c.b16 %v440, %v438
  %v677 = vpack.c.b16 %v441, %v439
  %v678 = vpack.c.b16 %v444, %v442
  %v679 = vpack.c.b16 %v445, %v443
  %v680 = vpack.c.b16 %v448, %v446
  %v681 = vpack.c.b16 %v449, %v447
  %v682 = vpack.c.b16 %v452, %v450
  %v683 = vpack.c.b16 %v453, %v451
  %v684 = vpack.c.b16 %v456, %v454
  %v685 = vpack.c.b16 %v457, %v455
  %v686 = vpack.c.b16 %v460, %v458
  %v687 = vpack.c.b16 %v461, %v459
  %v688 = vpack.c.b16 %v464, %v462
  %v689 = vpack.c.b16 %v465, %v463
  %v690 = vpack.c.b16 %v468, %v466
  %v691 = vpack.c.b16 %v469, %v467
  %v692 = vpack.c.b16 %v472, %v470
  %v693 = vpack.c.b16 %v473, %v471
  %v694 = vpack.c.b16 %v476, %v474
  %v695 = vpack.c.b16 %v477, %v475
  %v696 = vpack.c.b16 %v480, %v478
  %v697 = vpack.c.b16 %v481, %v479
  %v698 = vpack.c.b16 %v484, %v482
  %v699 = vpack.c.b16 %v485, %v483
  %v700 = vpack.c.b16 %v488, %v486
  %v701 = vpack.c.b16 %v489, %v487
  %v702 = vpack.c.b16 %v492, %v490
  %v703 = vpack.c.b16 %v493, %v491
  %v704 = vpack.c.b16 %v496, %v494
  %v705 = vpack.c.b16 %v497, %v495
  %v706 = vpack.c.b16 %v500, %v498
  %v707 = vpack.c.b16 %v501, %v499
  %v708 = vpack.c.b16 %v504, %v502
  %v709 = vpack.c.b16 %v505, %v503
  %v710 = vpack.c.b16 %v508, %v506
  %v711 = vpack.c.b16 %v509, %v507
  %v712 = vpack.c.b16 %v512, %v510
  %v713 = vpack.c.b16 %v513, %v511
  %v714 = vpack.c.b16 %v516, %v514
  %v715 = vpack.c.b16 %v517, %v515
  %v716 = vpack.c.b16 %v520, %v518
  %v717 = vpack.c.b16 %v521, %v519
  %v718 = vpack.c.b16 %v524, %v522
  %v719 = vpack.c.b16 %v525, %v523
  %v720 = vpack.c.b16 %v528, %v526
  %v721 = vpack.c.b16 %v529, %v527
  %v722 = vpack.c.b16 %v532, %v530
  %v723 = vpack.c.b16 %v533, %v531
  %v724 = vpack.c.b16 %v536, %v534
  %v725 = vpack.c.b16 %v537, %v535
  %v726 = vpack.c.b16 %v540, %v538
  %v727 = vpack.c.b16 %v541, %v539
  %v728 = vpack.c.b16 %v544, %v542
  %v729 = vpack.c.b16 %v545, %v543
  %v730 = vpack.c.b16 %v548, %v546
  %v731 = vpack.c.b16 %v549, %v547
  %v732 = vpack.c.b16 %v552, %v550
  %v733 = vpack.c.b16 %v553, %v551
  %v734 = vpack.c.b16 %v556, %v554
  %v735 = vpack.c.b16 %v557, %v555
  %v736 = vpack.c.b16 %v560, %v558
  %v737 = vpack.c.b16 %v561, %v559
  %v738 = vpack.c.b16 %v564, %v562
  %v739 = vpack.c.b16 %v565, %v563
  %v740 = vpack.c.b16 %v568, %v566
  %v741 = vpack.c.b16 %v569, %v567
  %v742 = vpack.c.b16 %v572, %v570
  %v743 = vpack.c.b16 %v573, %v571
  %v744 = vpack.c.b16 %v576, %v574
  %v745 = vpack.c.b16 %v577, %v575
  %v746 = vpack.c.b16 %v580, %v578
  %v747 = vpack.c.b16 %v581, %v579
  %v748 = vpack.c.b16 %v584, %v582
  %v749 = vpack.c.b16 %v585, %v583
  %v750 = vpack.c.b16 %v588, %v586
  %v751 = vpack.c.b16 %v589, %v587
  %v752 = vpack.c.b16 %v592, %v590
  %v753 = vpack.c.b16 %v593, %v591
  %v754 = vpack.c.b16 %v596, %v594
  %v755 = vpack.c.b16 %v597, %v595
  %v756 = vpack.c.b16 %v600, %v598
  %v757 = vpack.c.b16 %v601, %v599
  %v758 = vpack.c.b16 %v604, %v602
  %v759 = vpack.c.b16 %v605, %v603
  %v760 = vpack.c.b16 %v608, %v606
  %v761 = vpack.c.b16 %v609, %v607
  %v762 = vpack.c.b16 %v612, %v610
  %v763 = vpack.c.b16 %v613, %v611
  %v764 = vpack.c.b16 %v616, %v614
  %v765 = vpack.c.b16 %v617, %v615
  %v766 = vpack.c.b16 %v620, %v618
  %v767 = vpack.c.b16 %v621, %v619
  %v768 = vpack.c.b16 %v624, %v622
  %v769 = vpack.c.b16 %v625, %v623
  %914 = vmatpush.bf16.msra.mxu0 %v640
  %915 = vmatpush.bf16.msra.mxu0 %v638
  %916 = vmatpush.bf16.msra.mxu0 %v636
  %917 = vmatpush.bf16.msra.mxu0 %v634
  %918 = vmatpush.bf16.msra.mxu0 %v632
  %919 = vmatpush.bf16.msra.mxu0 %v630
  %920 = vmatpush.bf16.msra.mxu0 %v628
  %921 = vmatpush.bf16.msra.mxu0 %v626
  %922 = vmatmul.bf16.gmra.mxu0 %v174
  %v923 = vpop.f32.mrf.mxu0
  %v924 = vadd.f32 %v168, %v923
  %v925 = vpop.f32.mrf.mxu0
  %926 = vdwg.mxu0
  %927 = vmatpush.bf16.msra.mxu0 %v656
  %928 = vmatpush.bf16.msra.mxu0 %v654
  %929 = vmatpush.bf16.msra.mxu0 %v652
  %930 = vmatpush.bf16.msra.mxu0 %v650
  %931 = vmatpush.bf16.msra.mxu0 %v648
  %932 = vmatpush.bf16.msra.mxu0 %v646
  %933 = vmatpush.bf16.msra.mxu0 %v644
  %934 = vmatpush.bf16.msra.mxu0 %v642
  %935 = vmatmul.bf16.gmra.mxu0 %v175
  %v936 = vpop.f32.mrf.mxu0
  %v937 = vadd.f32 %v924, %v936
  %v938 = vpop.f32.mrf.mxu0
  %939 = vdwg.mxu0
  %940 = vmatpush.bf16.msra.mxu0 %v672
  %941 = vmatpush.bf16.msra.mxu0 %v670
  %942 = vmatpush.bf16.msra.mxu0 %v668
  %943 = vmatpush.bf16.msra.mxu0 %v666
  %944 = vmatpush.bf16.msra.mxu0 %v664
  %945 = vmatpush.bf16.msra.mxu0 %v662
  %946 = vmatpush.bf16.msra.mxu0 %v660
  %947 = vmatpush.bf16.msra.mxu0 %v658
  %948 = vmatmul.bf16.gmra.mxu0 %v176
  %v949 = vpop.f32.mrf.mxu0
  %v950 = vadd.f32 %v937, %v949
  %v951 = vpop.f32.mrf.mxu0
  %952 = vdwg.mxu0
  %953 = vmatpush.bf16.msra.mxu0 %v688
  %954 = vmatpush.bf16.msra.mxu0 %v686
  %955 = vmatpush.bf16.msra.mxu0 %v684
  %956 = vmatpush.bf16.msra.mxu0 %v682
  %957 = vmatpush.bf16.msra.mxu0 %v680
  %958 = vmatpush.bf16.msra.mxu0 %v678
  %959 = vmatpush.bf16.msra.mxu0 %v676
  %960 = vmatpush.bf16.msra.mxu0 %v674
  %961 = vmatmul.bf16.gmra.mxu0 %v177
  %v962 = vpop.f32.mrf.mxu0
  %v963 = vadd.f32 %v950, %v962
  %v964 = vpop.f32.mrf.mxu0
  %965 = vdwg.mxu0
  %966 = vmatpush.bf16.msra.mxu0 %v704
  %967 = vmatpush.bf16.msra.mxu0 %v702
  %968 = vmatpush.bf16.msra.mxu0 %v700
  %969 = vmatpush.bf16.msra.mxu0 %v698
  %970 = vmatpush.bf16.msra.mxu0 %v696
  %971 = vmatpush.bf16.msra.mxu0 %v694
  %972 = vmatpush.bf16.msra.mxu0 %v692
  %973 = vmatpush.bf16.msra.mxu0 %v690
  %974 = vmatmul.bf16.gmra.mxu0 %v178
  %v975 = vpop.f32.mrf.mxu0
  %v976 = vadd.f32 %v963, %v975
  %v977 = vpop.f32.mrf.mxu0
  %978 = vdwg.mxu0
  %979 = vmatpush.bf16.msra.mxu0 %v720
  %980 = vmatpush.bf16.msra.mxu0 %v718
  %981 = vmatpush.bf16.msra.mxu0 %v716
  %982 = vmatpush.bf16.msra.mxu0 %v714
  %983 = vmatpush.bf16.msra.mxu0 %v712
  %984 = vmatpush.bf16.msra.mxu0 %v710
  %985 = vmatpush.bf16.msra.mxu0 %v708
  %986 = vmatpush.bf16.msra.mxu0 %v706
  %987 = vmatmul.bf16.gmra.mxu0 %v179
  %v988 = vpop.f32.mrf.mxu0
  %v989 = vadd.f32 %v976, %v988
  %v990 = vpop.f32.mrf.mxu0
  %991 = vdwg.mxu0
  %992 = vmatpush.bf16.msra.mxu0 %v736
  %993 = vmatpush.bf16.msra.mxu0 %v734
  %994 = vmatpush.bf16.msra.mxu0 %v732
  %995 = vmatpush.bf16.msra.mxu0 %v730
  %996 = vmatpush.bf16.msra.mxu0 %v728
  %997 = vmatpush.bf16.msra.mxu0 %v726
  %998 = vmatpush.bf16.msra.mxu0 %v724
  %999 = vmatpush.bf16.msra.mxu0 %v722
  %1000 = vmatmul.bf16.gmra.mxu0 %v180
  %v1001 = vpop.f32.mrf.mxu0
  %v1002 = vadd.f32 %v989, %v1001
  %v1003 = vpop.f32.mrf.mxu0
  %1004 = vdwg.mxu0
  %1005 = vmatpush.bf16.msra.mxu0 %v752
  %1006 = vmatpush.bf16.msra.mxu0 %v750
  %1007 = vmatpush.bf16.msra.mxu0 %v748
  %1008 = vmatpush.bf16.msra.mxu0 %v746
  %1009 = vmatpush.bf16.msra.mxu0 %v744
  %1010 = vmatpush.bf16.msra.mxu0 %v742
  %1011 = vmatpush.bf16.msra.mxu0 %v740
  %1012 = vmatpush.bf16.msra.mxu0 %v738
  %1013 = vmatmul.bf16.gmra.mxu0 %v181
  %v1014 = vpop.f32.mrf.mxu0
  %v1015 = vadd.f32 %v1002, %v1014
  %v1016 = vpop.f32.mrf.mxu0
  %1017 = vdwg.mxu0
  %1018 = vmatpush.bf16.msra.mxu0 %v768
  %1019 = vmatpush.bf16.msra.mxu0 %v766
  %1020 = vmatpush.bf16.msra.mxu0 %v764
  %1021 = vmatpush.bf16.msra.mxu0 %v762
  %1022 = vmatpush.bf16.msra.mxu0 %v760
  %1023 = vmatpush.bf16.msra.mxu0 %v758
  %1024 = vmatpush.bf16.msra.mxu0 %v756
  %1025 = vmatpush.bf16.msra.mxu0 %v754
  %1026 = vmatmul.bf16.gmra.mxu0 %v184
  %v1027 = vpop.f32.mrf.mxu0
  %v1028 = vadd.f32 %v1015, %v1027
  %v1029 = vpop.f32.mrf.mxu0
  %1030 = vdwg.mxu0
  %1031 = vmatpush.bf16.msra.mxu0 %v641
  %1032 = vmatpush.bf16.msra.mxu0 %v639
  %1033 = vmatpush.bf16.msra.mxu0 %v637
  %1034 = vmatpush.bf16.msra.mxu0 %v635
  %1035 = vmatpush.bf16.msra.mxu0 %v633
  %1036 = vmatpush.bf16.msra.mxu0 %v631
  %1037 = vmatpush.bf16.msra.mxu0 %v629
  %1038 = vmatpush.bf16.msra.mxu0 %v627
  %1039 = vmatmul.bf16.gmra.mxu0 %v174
  %v1040 = vpop.f32.mrf.mxu0
  %v1041 = vadd.f32 %v169, %v1040
  %v1042 = vpop.f32.mrf.mxu0
  %1043 = vdwg.mxu0
  %1044 = vmatpush.bf16.msra.mxu0 %v657
  %1045 = vmatpush.bf16.msra.mxu0 %v655
  %1046 = vmatpush.bf16.msra.mxu0 %v653
  %1047 = vmatpush.bf16.msra.mxu0 %v651
  %1048 = vmatpush.bf16.msra.mxu0 %v649
  %1049 = vmatpush.bf16.msra.mxu0 %v647
  %1050 = vmatpush.bf16.msra.mxu0 %v645
  %1051 = vmatpush.bf16.msra.mxu0 %v643
  %1052 = vmatmul.bf16.gmra.mxu0 %v175
  %v1053 = vpop.f32.mrf.mxu0
  %v1054 = vadd.f32 %v1041, %v1053
  %v1055 = vpop.f32.mrf.mxu0
  %1056 = vdwg.mxu0
  %1057 = vmatpush.bf16.msra.mxu0 %v673
  %1058 = vmatpush.bf16.msra.mxu0 %v671
  %1059 = vmatpush.bf16.msra.mxu0 %v669
  %1060 = vmatpush.bf16.msra.mxu0 %v667
  %1061 = vmatpush.bf16.msra.mxu0 %v665
  %1062 = vmatpush.bf16.msra.mxu0 %v663
  %1063 = vmatpush.bf16.msra.mxu0 %v661
  %1064 = vmatpush.bf16.msra.mxu0 %v659
  %1065 = vmatmul.bf16.gmra.mxu0 %v176
  %v1066 = vpop.f32.mrf.mxu0
  %v1067 = vadd.f32 %v1054, %v1066
  %v1068 = vpop.f32.mrf.mxu0
  %1069 = vdwg.mxu0
  %1070 = vmatpush.bf16.msra.mxu0 %v689
  %1071 = vmatpush.bf16.msra.mxu0 %v687
  %1072 = vmatpush.bf16.msra.mxu0 %v685
  %1073 = vmatpush.bf16.msra.mxu0 %v683
  %1074 = vmatpush.bf16.msra.mxu0 %v681
  %1075 = vmatpush.bf16.msra.mxu0 %v679
  %1076 = vmatpush.bf16.msra.mxu0 %v677
  %1077 = vmatpush.bf16.msra.mxu0 %v675
  %1078 = vmatmul.bf16.gmra.mxu0 %v177
  %v1079 = vpop.f32.mrf.mxu0
  %v1080 = vadd.f32 %v1067, %v1079
  %v1081 = vpop.f32.mrf.mxu0
  %1082 = vdwg.mxu0
  %1083 = vmatpush.bf16.msra.mxu0 %v705
  %1084 = vmatpush.bf16.msra.mxu0 %v703
  %1085 = vmatpush.bf16.msra.mxu0 %v701
  %1086 = vmatpush.bf16.msra.mxu0 %v699
  %1087 = vmatpush.bf16.msra.mxu0 %v697
  %1088 = vmatpush.bf16.msra.mxu0 %v695
  %1089 = vmatpush.bf16.msra.mxu0 %v693
  %1090 = vmatpush.bf16.msra.mxu0 %v691
  %1091 = vmatmul.bf16.gmra.mxu0 %v178
  %v1092 = vpop.f32.mrf.mxu0
  %v1093 = vadd.f32 %v1080, %v1092
  %v1094 = vpop.f32.mrf.mxu0
  %1095 = vdwg.mxu0
  %1096 = vmatpush.bf16.msra.mxu0 %v721
  %1097 = vmatpush.bf16.msra.mxu0 %v719
  %1098 = vmatpush.bf16.msra.mxu0 %v717
  %1099 = vmatpush.bf16.msra.mxu0 %v715
  %1100 = vmatpush.bf16.msra.mxu0 %v713
  %1101 = vmatpush.bf16.msra.mxu0 %v711
  %1102 = vmatpush.bf16.msra.mxu0 %v709
  %1103 = vmatpush.bf16.msra.mxu0 %v707
  %1104 = vmatmul.bf16.gmra.mxu0 %v179
  %v1105 = vpop.f32.mrf.mxu0
  %v1106 = vadd.f32 %v1093, %v1105
  %v1107 = vpop.f32.mrf.mxu0
  %1108 = vdwg.mxu0
  %1109 = vmatpush.bf16.msra.mxu0 %v737
  %1110 = vmatpush.bf16.msra.mxu0 %v735
  %1111 = vmatpush.bf16.msra.mxu0 %v733
  %1112 = vmatpush.bf16.msra.mxu0 %v731
  %1113 = vmatpush.bf16.msra.mxu0 %v729
  %1114 = vmatpush.bf16.msra.mxu0 %v727
  %1115 = vmatpush.bf16.msra.mxu0 %v725
  %1116 = vmatpush.bf16.msra.mxu0 %v723
  %1117 = vmatmul.bf16.gmra.mxu0 %v180
  %v1118 = vpop.f32.mrf.mxu0
  %v1119 = vadd.f32 %v1106, %v1118
  %v1120 = vpop.f32.mrf.mxu0
  %1121 = vdwg.mxu0
  %1122 = vmatpush.bf16.msra.mxu0 %v753
  %1123 = vmatpush.bf16.msra.mxu0 %v751
  %1124 = vmatpush.bf16.msra.mxu0 %v749
  %1125 = vmatpush.bf16.msra.mxu0 %v747
  %1126 = vmatpush.bf16.msra.mxu0 %v745
  %1127 = vmatpush.bf16.msra.mxu0 %v743
  %1128 = vmatpush.bf16.msra.mxu0 %v741
  %1129 = vmatpush.bf16.msra.mxu0 %v739
  %1130 = vmatmul.bf16.gmra.mxu0 %v181
  %v1131 = vpop.f32.mrf.mxu0
  %v1132 = vadd.f32 %v1119, %v1131
  %v1133 = vpop.f32.mrf.mxu0
  %1134 = vdwg.mxu0
  %1135 = vmatpush.bf16.msra.mxu0 %v769
  %1136 = vmatpush.bf16.msra.mxu0 %v767
  %1137 = vmatpush.bf16.msra.mxu0 %v765
  %1138 = vmatpush.bf16.msra.mxu0 %v763
  %1139 = vmatpush.bf16.msra.mxu0 %v761
  %1140 = vmatpush.bf16.msra.mxu0 %v759
  %1141 = vmatpush.bf16.msra.mxu0 %v757
  %1142 = vmatpush.bf16.msra.mxu0 %v755
  %1143 = vmatmul.bf16.gmra.mxu0 %v184
  %v1144 = vpop.f32.mrf.mxu0
  %v1145 = vadd.f32 %v1132, %v1144
  %v1146 = vpop.f32.mrf.mxu0
  %1147 = vdwg.mxu0
  %v1148 = vmax.f32 %v1028, 0.0
  %v1149 = vmax.f32 %v1145, 0.0
  %v1150 = vpack.c.bf16 %v1148, %v1148
  %v1151 = vpack.c.bf16 %v1149, %v1149
  %v1152 = vld [vmem:[%s3] sm:$0xf]
  %v1153 = vld [vmem:[%s3 + $0x4] sm:$0xf]
  %v1154 = vld [vmem:[%s3 + $0x8] sm:$0xf]
  %v1155 = vld [vmem:[%s3 + $0xc] sm:$0xf]
  %v1156 = vld [vmem:[%s3 + $0x10] sm:$0xf]
  %v1157 = vld [vmem:[%s3 + $0x14] sm:$0xf]
  %v1158 = vld [vmem:[%s3 + $0x18] sm:$0xf]
  %v1159 = vld [vmem:[%s3 + $0x1c] sm:$0xf]
  %v1160 = vld [vmem:[%s3 + $0x20] sm:$0xf]
  %v1161 = vld [vmem:[%s3 + $0x24] sm:$0xf]
  %v1162 = vld [vmem:[%s3 + $0x28] sm:$0xf]
  %v1163 = vld [vmem:[%s3 + $0x2c] sm:$0xf]
  %v1164 = vld [vmem:[%s3 + $0x30] sm:$0xf]
  %v1165 = vld [vmem:[%s3 + $0x34] sm:$0xf]
  %v1166 = vld [vmem:[%s3 + $0x38] sm:$0xf]
  %v1167 = vld [vmem:[%s3 + $0x3c] sm:$0xf]
  %v1168 = vld [vmem:[%s3 + $0x40] sm:$0xf]
  %v1169 = vld [vmem:[%s3 + $0x44] sm:$0xf]
  %v1170 = vld [vmem:[%s3 + $0x48] sm:$0xf]
  %v1171 = vld [vmem:[%s3 + $0x4c] sm:$0xf]
  %v1172 = vld [vmem:[%s3 + $0x50] sm:$0xf]
  %v1173 = vld [vmem:[%s3 + $0x54] sm:$0xf]
  %v1174 = vld [vmem:[%s3 + $0x58] sm:$0xf]
  %v1175 = vld [vmem:[%s3 + $0x5c] sm:$0xf]
  %v1176 = vld [vmem:[%s3 + $0x60] sm:$0xf]
  %v1177 = vld [vmem:[%s3 + $0x64] sm:$0xf]
  %v1178 = vld [vmem:[%s3 + $0x68] sm:$0xf]
  %v1179 = vld [vmem:[%s3 + $0x6c] sm:$0xf]
  %v1180 = vld [vmem:[%s3 + $0x70] sm:$0xf]
  %v1181 = vld [vmem:[%s3 + $0x74] sm:$0xf]
  %v1182 = vld [vmem:[%s3 + $0x78] sm:$0xf]
  %v1183 = vld [vmem:[%s3 + $0x7c] sm:$0xf]
  %v1184 = vld [vmem:[%s4] sm:$0x1]
  %v1186 = vperm.slane %v1184, 0
  %v1220 = vunpack.c.l.b16 %v1152
  %v1221 = vunpack.c.l.b16 %v1153
  %v1222 = vunpack.c.l.b16 %v1154
  %v1223 = vunpack.c.l.b16 %v1155
  %v1224 = vunpack.c.l.b16 %v1156
  %v1225 = vunpack.c.l.b16 %v1157
  %v1226 = vunpack.c.l.b16 %v1158
  %v1227 = vunpack.c.l.b16 %v1159
  %v1228 = vunpack.c.l.b16 %v1160
  %v1229 = vunpack.c.l.b16 %v1161
  %v1230 = vunpack.c.l.b16 %v1162
  %v1231 = vunpack.c.l.b16 %v1163
  %v1232 = vunpack.c.l.b16 %v1164
  %v1233 = vunpack.c.l.b16 %v1165
  %v1234 = vunpack.c.l.b16 %v1166
  %v1235 = vunpack.c.l.b16 %v1167
  %v1236 = vunpack.c.l.b16 %v1168
  %v1237 = vunpack.c.l.b16 %v1169
  %v1238 = vunpack.c.l.b16 %v1170
  %v1239 = vunpack.c.l.b16 %v1171
  %v1240 = vunpack.c.l.b16 %v1172
  %v1241 = vunpack.c.l.b16 %v1173
  %v1242 = vunpack.c.l.b16 %v1174
  %v1243 = vunpack.c.l.b16 %v1175
  %v1244 = vunpack.c.l.b16 %v1176
  %v1245 = vunpack.c.l.b16 %v1177
  %v1246 = vunpack.c.l.b16 %v1178
  %v1247 = vunpack.c.l.b16 %v1179
  %v1248 = vunpack.c.l.b16 %v1180
  %v1249 = vunpack.c.l.b16 %v1181
  %v1250 = vunpack.c.l.b16 %v1182
  %v1251 = vunpack.c.l.b16 %v1183
  %v1252 = vpack.c.b16 %v1221, %v1220
  %v1253 = vpack.c.b16 %v1223, %v1222
  %v1254 = vpack.c.b16 %v1225, %v1224
  %v1255 = vpack.c.b16 %v1227, %v1226
  %v1256 = vpack.c.b16 %v1229, %v1228
  %v1257 = vpack.c.b16 %v1231, %v1230
  %v1258 = vpack.c.b16 %v1233, %v1232
  %v1259 = vpack.c.b16 %v1235, %v1234
  %v1260 = vpack.c.b16 %v1237, %v1236
  %v1261 = vpack.c.b16 %v1239, %v1238
  %v1262 = vpack.c.b16 %v1241, %v1240
  %v1263 = vpack.c.b16 %v1243, %v1242
  %v1264 = vpack.c.b16 %v1245, %v1244
  %v1265 = vpack.c.b16 %v1247, %v1246
  %v1266 = vpack.c.b16 %v1249, %v1248
  %v1267 = vpack.c.b16 %v1251, %v1250
  %1284 = vmatpush.bf16.msra.mxu0 %v1259
  %1285 = vmatpush.bf16.msra.mxu0 %v1258
  %1286 = vmatpush.bf16.msra.mxu0 %v1257
  %1287 = vmatpush.bf16.msra.mxu0 %v1256
  %1288 = vmatpush.bf16.msra.mxu0 %v1255
  %1289 = vmatpush.bf16.msra.mxu0 %v1254
  %1290 = vmatpush.bf16.msra.mxu0 %v1253
  %1291 = vmatpush.bf16.msra.mxu0 %v1252
  %1292 = vmatmul.bf16.gmra.mxu0 %v1150
  %v1293 = vpop.f32.mrf.mxu0
  %v1294 = vadd.f32 %v1186, %v1293
  %v1295 = vpop.f32.mrf.mxu0
  %1296 = vdwg.mxu0
  %1297 = vmatpush.bf16.msra.mxu0 %v1267
  %1298 = vmatpush.bf16.msra.mxu0 %v1266
  %1299 = vmatpush.bf16.msra.mxu0 %v1265
  %1300 = vmatpush.bf16.msra.mxu0 %v1264
  %1301 = vmatpush.bf16.msra.mxu0 %v1263
  %1302 = vmatpush.bf16.msra.mxu0 %v1262
  %1303 = vmatpush.bf16.msra.mxu0 %v1261
  %1304 = vmatpush.bf16.msra.mxu0 %v1260
  %1305 = vmatmul.bf16.gmra.mxu0 %v1151
  %v1306 = vpop.f32.mrf.mxu0
  %v1307 = vadd.f32 %v1294, %v1306
  %v1308 = vpop.f32.mrf.mxu0
  %1309 = vdwg.mxu0
  %1310 = vst [vmem:[%s5] sm:$0x3] %v1307
  // Predicated region
  $region22: #{atari_forward.5} parent=0 // pred_check
    _
  $region23: #{atari_forward.5} parent=0 // pred_check_branch
    %1312 = sbr.rel (0) target = $region25
  $region24: #{atari_forward.5} parent=0 // pred_region
    _
  $region25: #{atari_forward.5} parent=0 // pred_fallthru
    _
  // Predicated region
  $region26: #{atari_forward.5} parent=0 // pred_check
    _
  $region27: #{atari_forward.5} parent=0 // pred_check_branch
    %1314 = sbr.rel (0) target = $region29
  $region28: #{atari_forward.5} parent=0 // pred_region
    _
  $region29: #{atari_forward.5} parent=0 // pred_fallthru
    _

</llo_original>
